<compile_context>
chip_gen: v5e
topology: v5e:2x2
jax: 0.10.0
libtpu: 0.0.40
codegen_flags: <defaults>
</compile_context>

<pallas_src>
import functools

import jax
import jax.numpy as jnp
from jax.experimental import pallas as pl
from jax.experimental.pallas import tpu as pltpu


def _leaky_relu(h, negative_slope=0.01):
    # max(x, slope * x) == LeakyReLU(x) for slope in (0, 1).
    return jnp.maximum(h, negative_slope * h)


def _resnet_dense_kernel(x_ref, wr_ref, br_ref, wl_ref, bl_ref, out_ref, *, nlayers):
    """Weights fully resident in VMEM.

    x_ref  : (TB, D)     input tile
    wr_ref : (D, H)      residual Linear weight (pre-transposed to (in, out))
    br_ref : (1, H)      residual Linear bias
    wl_ref : (L, H, H)   stacked layer weights (pre-transposed)
    bl_ref : (L, 1, H)   stacked layer biases
    out_ref: (TB, H)
    """
    x = x_ref[...]

    # Sequential branch first: keeps the residual tile's live range short.
    h = x
    for l in range(nlayers):  # nlayers is static -> unrolled at trace time
        z = jnp.dot(h, wl_ref[l], preferred_element_type=jnp.float32)
        z = z + bl_ref[l]
        h = _leaky_relu(z).astype(x.dtype)

    residual = jnp.dot(x, wr_ref[...], preferred_element_type=jnp.float32)
    residual = residual + br_ref[...]

    out_ref[...] = (residual + h).astype(out_ref.dtype)


def _resnet_dense_kernel_stream(x_ref, wr_ref, br_ref, wl_hbm, bl_ref, out_ref,
                                wbuf, sem, *, nlayers):
    """Layer weights stay in HBM; manual double buffer of one (H, H) layer.

    wl_hbm : (L, H, H) ref in HBM (memory_space=pl.ANY)
    wbuf   : VMEM scratch (2, H, H), sem: DMA semaphores (2,)
    """
    x = x_ref[...]

    # Prime: prefetch layer 0 into slot 0.
    pltpu.make_async_copy(wl_hbm.at[0], wbuf.at[0], sem.at[0]).start()

    h = x
    for l in range(nlayers):  # static -> unrolled
        slot = l % 2
        pltpu.make_async_copy(wl_hbm.at[l], wbuf.at[slot], sem.at[slot]).wait()
        if l + 1 < nlayers:
            nxt = (l + 1) % 2
            # Prefetch next layer's weights while the MXU runs this layer.
            pltpu.make_async_copy(wl_hbm.at[l + 1], wbuf.at[nxt], sem.at[nxt]).start()
        z = jnp.dot(h, wbuf[slot], preferred_element_type=jnp.float32)
        z = z + bl_ref[l]
        h = _leaky_relu(z).astype(x.dtype)

    residual = jnp.dot(x, wr_ref[...], preferred_element_type=jnp.float32)
    residual = residual + br_ref[...]

    out_ref[...] = (residual + h).astype(out_ref.dtype)


def resnet_dense_forward(x, wr, br, wl, bl, *, batch_tile=128,
                         stream_layer_weights=False):
    """x: (B, D), wr: (D, H), br: (H,), wl: (L, H, H), bl: (L, H).

    Weights must be pre-transposed to (in, out) layout.
    stream_layer_weights=True keeps `wl` in HBM and streams one layer at a
    time (use when L*H*H does not fit VMEM, e.g. large models on v7x).
    """
    B, D = x.shape
    H = wr.shape[1]
    L = wl.shape[0]

    br2 = br.reshape(1, H)        # biases kept >= 2D for TPU-friendly layouts
    bl3 = bl.reshape(L, 1, H)     # bl_ref[l] -> (1, H), no reshape in the loop

    # Batch tiling: small batches -> one full block; otherwise pad to a
    # multiple of batch_tile so the grid has >= 2 blocks.
    if B <= batch_tile:
        batch_tile = B
        x_p = x
    else:
        pad = (-B) % batch_tile
        x_p = jnp.pad(x, ((0, pad), (0, 0))) if pad else x
    Bp = x_p.shape[0]
    grid = (Bp // batch_tile,)

    nbytes = lambda a: int(a.size) * a.dtype.itemsize
    weight_bytes = nbytes(wr) + nbytes(br2) + nbytes(bl3)
    stream_scratch = 2 * H * H * wl.dtype.itemsize if stream_layer_weights else 0
    if not stream_layer_weights:
        weight_bytes += nbytes(wl)
    io_bytes = 2 * batch_tile * (D + H) * x.dtype.itemsize   # double-buffered x/out tiles
    needed = 2 * weight_bytes + io_bytes + stream_scratch    # worst case (double-buffered weights)
    vmem_limit = int(min(max(needed + (8 << 20), 32 << 20), 120 << 20))

    flops = 2 * Bp * H * (D + L * H) + Bp * H * (2 * L + 2)
    bytes_accessed = (nbytes(x_p) + Bp * H * x.dtype.itemsize +
                      nbytes(wr) + nbytes(wl) + nbytes(br2) + nbytes(bl3))
    cost = pl.CostEstimate(flops=flops, transcendentals=0,
                           bytes_accessed=bytes_accessed)

    def const_spec(shape, nbuf):
        ndim = len(shape)
        if nbuf is None:
            return pl.BlockSpec(shape, lambda i: (0,) * ndim)
        # Grid-invariant block: single-buffer to halve weight VMEM.
        return pl.BlockSpec(shape, lambda i: (0,) * ndim,
                            pipeline_mode=pl.Buffered(nbuf))

    def build(weight_buffers):
        if stream_layer_weights:
            kernel = functools.partial(_resnet_dense_kernel_stream, nlayers=L)
            wl_spec = pl.BlockSpec(memory_space=pl.ANY)   # stays in HBM
            scratch = [pltpu.VMEM((2, H, H), wl.dtype),
                       pltpu.SemaphoreType.DMA((2,))]
        else:
            kernel = functools.partial(_resnet_dense_kernel, nlayers=L)
            wl_spec = const_spec((L, H, H), weight_buffers)
            scratch = []
        return pl.pallas_call(
            kernel,
            out_shape=jax.ShapeDtypeStruct((Bp, H), x.dtype),
            grid_spec=pltpu.PrefetchScalarGridSpec(
                num_scalar_prefetch=0,
                grid=grid,
                in_specs=[
                    pl.BlockSpec((batch_tile, D), lambda i: (i, 0)),   # x tile
                    const_spec((D, H), weight_buffers),                # residual W
                    const_spec((1, H), weight_buffers),                # residual b
                    wl_spec,                                           # layer Ws
                    const_spec((L, 1, H), weight_buffers),             # layer bs
                ],
                out_specs=pl.BlockSpec((batch_tile, H), lambda i: (i, 0)),
                scratch_shapes=scratch,
            ),
            compiler_params=pltpu.CompilerParams(
                dimension_semantics=("parallel",),
                vmem_limit_bytes=vmem_limit,
            ),
            cost_estimate=cost,
        )

    try:
        out = jax.block_until_ready(build(weight_buffers=1)(x_p, wr, br2, wl, bl3))
    except Exception:
        # This JAX build rejected single-buffered pipeline_mode on the
        # grid-invariant inputs; fall back to default double-buffering.
        out = jax.block_until_ready(build(weight_buffers=None)(x_p, wr, br2, wl, bl3))

    return out[:B] if out.shape[0] != B else out


def resnet_dense_reference(x, wr, br, wl, bl):
    """Pure-JAX reference mirroring the PyTorch forward (and kernel dtype flow)."""
    hi = jax.lax.Precision.HIGHEST
    residual = jnp.dot(x, wr, preferred_element_type=jnp.float32, precision=hi) + br
    h = x
    for l in range(wl.shape[0]):
        z = jnp.dot(h, wl[l], preferred_element_type=jnp.float32, precision=hi) + bl[l]
        h = jnp.where(z >= 0, z, 0.01 * z).astype(x.dtype)
    return (residual + h).astype(x.dtype)


if __name__ == "__main__":
    # Small but lane-aligned shapes: feature dim 128 (full MXU lanes, lane-dense
    # output stores); batch 256 with batch_tile=128 -> grid of 2 blocks.
    B, D, NLAYERS = 256, 128, 2   # input_size == hidden_size (required by the module)

    key = jax.random.PRNGKey(0)
    kx, kwr, kbr, kwl, kbl = jax.random.split(key, 5)

    x = jax.random.normal(kx, (B, D), dtype=jnp.float32)
    # Deterministic synthetic parameters (nn.Linear-like uniform init), stored
    # directly in (in, out) layout.
    bound = 1.0 / (D ** 0.5)
    wr = jax.random.uniform(kwr, (D, D), minval=-bound, maxval=bound, dtype=jnp.float32)
    br = jax.random.uniform(kbr, (D,), minval=-bound, maxval=bound, dtype=jnp.float32)
    wl = jax.random.uniform(kwl, (NLAYERS, D, D), minval=-bound, maxval=bound, dtype=jnp.float32)
    bl = jax.random.uniform(kbl, (NLAYERS, D), minval=-bound, maxval=bound, dtype=jnp.float32)

    ref = resnet_dense_reference(x, wr, br, wl, bl)

    # 1) Resident-weight path (weights auto-pipelined into VMEM).
    out = jax.block_until_ready(resnet_dense_forward(x, wr, br, wl, bl, batch_tile=128))
    assert out.shape == (B, D)
    assert jnp.allclose(out, ref, atol=1e-4, rtol=1e-4), "resident path mismatch"

    # 2) Streaming path (layer weights stay in HBM, manual per-layer double buffer).
    out_s = jax.block_until_ready(
        resnet_dense_forward(x, wr, br, wl, bl, batch_tile=128, stream_layer_weights=True))
    assert jnp.allclose(out_s, ref, atol=1e-4, rtol=1e-4), "streaming path mismatch"

    # 3) bf16 weights/activations with f32 MXU accumulation (v6e/v7x recommendation).
    to_bf16 = lambda a: a.astype(jnp.bfloat16)
    xb, wrb, brb, wlb, blb = map(to_bf16, (x, wr, br, wl, bl))
    out_b = jax.block_until_ready(
        resnet_dense_forward(xb, wrb, brb, wlb, blb, batch_tile=128))
    ref_b = resnet_dense_reference(xb, wrb, brb, wlb, blb)
    assert out_b.dtype == jnp.bfloat16
    assert jnp.allclose(out_b.astype(jnp.float32), ref_b.astype(jnp.float32),
                        atol=2e-2, rtol=2e-2), "bf16 path mismatch"

    print("KERNEL_OK")
</pallas_src>

<mosaic_0001>
module attributes {stable_mosaic.version = 11 : i64} {
  func.func @_resnet_dense_kernel(%arg0: i32, %arg1: memref<128x128xf32, #tpu.memory_space<vmem>>, %arg2: memref<128x128xf32, #tpu.memory_space<vmem>>, %arg3: memref<1x128xf32, #tpu.memory_space<vmem>>, %arg4: memref<2x128x128xf32, #tpu.memory_space<vmem>>, %arg5: memref<2x1x128xf32, #tpu.memory_space<vmem>>, %arg6: memref<128x128xf32, #tpu.memory_space<vmem>>) attributes {dimension_semantics = [#tpu.dimension_semantics<parallel>], iteration_bounds = array<i64: 2>, scalar_prefetch = 0 : i64, scratch_operands = 0 : i64, tpu.core_type = #tpu.core_type<tc>, window_params = [{transform_indices = @transform_0, window_bounds = array<i64: 128, 128>}, {pipeline_mode = #tpu.pipeline_mode<synchronous>, transform_indices = @transform_1, window_bounds = array<i64: 128, 128>}, {pipeline_mode = #tpu.pipeline_mode<synchronous>, transform_indices = @transform_2, window_bounds = array<i64: 1, 128>}, {pipeline_mode = #tpu.pipeline_mode<synchronous>, transform_indices = @transform_3, window_bounds = array<i64: 2, 128, 128>}, {pipeline_mode = #tpu.pipeline_mode<synchronous>, transform_indices = @transform_4, window_bounds = array<i64: 2, 1, 128>}, {transform_indices = @transform_5, window_bounds = array<i64: 128, 128>}]} {
    %c0 = arith.constant 0 : index
    %c0_0 = arith.constant 0 : index
    %0 = vector.load %arg1[%c0, %c0_0] : memref<128x128xf32, #tpu.memory_space<vmem>>, vector<128x128xf32>
    %c0_1 = arith.constant 0 : index
    %c0_2 = arith.constant 0 : index
    %c0_3 = arith.constant 0 : index
    %1 = vector.load %arg4[%c0_1, %c0_2, %c0_3] : memref<2x128x128xf32, #tpu.memory_space<vmem>>, vector<1x128x128xf32>
    %2 = vector.shape_cast %1 : vector<1x128x128xf32> to vector<128x128xf32>
    %cst = arith.constant dense<0.000000e+00> : vector<128x128xf32>
    %3 = tpu.matmul %0, %2, %cst {dimension_numbers = #tpu.dot_dimension_numbers<[1], [0], [0], [1], [0, 0, 1, 1], [], []>} : vector<128x128xf32>, vector<128x128xf32>, vector<128x128xf32> -> vector<128x128xf32>
    %c0_4 = arith.constant 0 : index
    %c0_5 = arith.constant 0 : index
    %c0_6 = arith.constant 0 : index
    %4 = vector.load %arg5[%c0_4, %c0_5, %c0_6] : memref<2x1x128xf32, #tpu.memory_space<vmem>>, vector<1x1x128xf32>
    %5 = vector.shape_cast %4 : vector<1x1x128xf32> to vector<1x128xf32>
    %6 = vector.broadcast %5 : vector<1x128xf32> to vector<128x128xf32>
    %7 = arith.addf %3, %6 : vector<128x128xf32>
    %cst_7 = arith.constant 0.00999999977 : f32
    %8 = vector.broadcast %cst_7 : f32 to vector<128x128xf32>
    %9 = arith.mulf %8, %7 : vector<128x128xf32>
    %10 = arith.maximumf %7, %9 : vector<128x128xf32>
    %c1 = arith.constant 1 : index
    %c0_8 = arith.constant 0 : index
    %c0_9 = arith.constant 0 : index
    %11 = vector.load %arg4[%c1, %c0_8, %c0_9] : memref<2x128x128xf32, #tpu.memory_space<vmem>>, vector<1x128x128xf32>
    %12 = vector.shape_cast %11 : vector<1x128x128xf32> to vector<128x128xf32>
    %cst_10 = arith.constant dense<0.000000e+00> : vector<128x128xf32>
    %13 = tpu.matmul %10, %12, %cst_10 {dimension_numbers = #tpu.dot_dimension_numbers<[1], [0], [0], [1], [0, 0, 1, 1], [], []>} : vector<128x128xf32>, vector<128x128xf32>, vector<128x128xf32> -> vector<128x128xf32>
    %c1_11 = arith.constant 1 : index
    %c0_12 = arith.constant 0 : index
    %c0_13 = arith.constant 0 : index
    %14 = vector.load %arg5[%c1_11, %c0_12, %c0_13] : memref<2x1x128xf32, #tpu.memory_space<vmem>>, vector<1x1x128xf32>
    %15 = vector.shape_cast %14 : vector<1x1x128xf32> to vector<1x128xf32>
    %16 = vector.broadcast %15 : vector<1x128xf32> to vector<128x128xf32>
    %17 = arith.addf %13, %16 : vector<128x128xf32>
    %cst_14 = arith.constant 0.00999999977 : f32
    %18 = vector.broadcast %cst_14 : f32 to vector<128x128xf32>
    %19 = arith.mulf %18, %17 : vector<128x128xf32>
    %20 = arith.maximumf %17, %19 : vector<128x128xf32>
    %c0_15 = arith.constant 0 : index
    %c0_16 = arith.constant 0 : index
    %21 = vector.load %arg2[%c0_15, %c0_16] : memref<128x128xf32, #tpu.memory_space<vmem>>, vector<128x128xf32>
    %cst_17 = arith.constant dense<0.000000e+00> : vector<128x128xf32>
    %22 = tpu.matmul %0, %21, %cst_17 {dimension_numbers = #tpu.dot_dimension_numbers<[1], [0], [0], [1], [0, 0, 1, 1], [], []>} : vector<128x128xf32>, vector<128x128xf32>, vector<128x128xf32> -> vector<128x128xf32>
    %c0_18 = arith.constant 0 : index
    %c0_19 = arith.constant 0 : index
    %23 = vector.load %arg3[%c0_18, %c0_19] : memref<1x128xf32, #tpu.memory_space<vmem>>, vector<1x128xf32>
    %24 = vector.broadcast %23 : vector<1x128xf32> to vector<128x128xf32>
    %25 = arith.addf %22, %24 : vector<128x128xf32>
    %26 = arith.addf %25, %20 : vector<128x128xf32>
    %c0_20 = arith.constant 0 : index
    %c0_21 = arith.constant 0 : index
    %27 = vector.load %arg6[%c0_20, %c0_21] : memref<128x128xf32, #tpu.memory_space<vmem>>, vector<128x128xf32>
    tpu.vector_store %arg6[%c0_20, %c0_21], %26 {strides = array<i32>} : memref<128x128xf32, #tpu.memory_space<vmem>>, vector<128x128xf32>,
    return
  }
  func.func @transform_0(%arg0: i32) -> (i32, i32) {
    %c0_i32 = arith.constant 0 : i32
    %c0_i32_0 = arith.constant 0 : i32
    return %arg0, %c0_i32 : i32, i32
  }
  func.func @transform_1(%arg0: i32) -> (i32, i32) {
    %c0_i32 = arith.constant 0 : i32
    %c0_i32_0 = arith.constant 0 : i32
    %c0_i32_1 = arith.constant 0 : i32
    return %c0_i32, %c0_i32_0 : i32, i32
  }
  func.func @transform_2(%arg0: i32) -> (i32, i32) {
    %c0_i32 = arith.constant 0 : i32
    %c0_i32_0 = arith.constant 0 : i32
    %c0_i32_1 = arith.constant 0 : i32
    return %c0_i32, %c0_i32_0 : i32, i32
  }
  func.func @transform_3(%arg0: i32) -> (i32, i32, i32) {
    %c0_i32 = arith.constant 0 : i32
    %c0_i32_0 = arith.constant 0 : i32
    %c0_i32_1 = arith.constant 0 : i32
    %c0_i32_2 = arith.constant 0 : i32
    return %c0_i32, %c0_i32_0, %c0_i32_1 : i32, i32, i32
  }
  func.func @transform_4(%arg0: i32) -> (i32, i32, i32) {
    %c0_i32 = arith.constant 0 : i32
    %c0_i32_0 = arith.constant 0 : i32
    %c0_i32_1 = arith.constant 0 : i32
    %c0_i32_2 = arith.constant 0 : i32
    return %c0_i32, %c0_i32_0, %c0_i32_1 : i32, i32, i32
  }
  func.func @transform_5(%arg0: i32) -> (i32, i32) {
    %c0_i32 = arith.constant 0 : i32
    %c0_i32_0 = arith.constant 0 : i32
    return %arg0, %c0_i32 : i32, i32
  }
}

module attributes {stable_mosaic.version = 11 : i64} {
  func.func @_resnet_dense_kernel(%arg0: i32, %arg1: memref<128x128xf32, #tpu.memory_space<vmem>>, %arg2: memref<128x128xf32, #tpu.memory_space<vmem>>, %arg3: memref<1x128xf32, #tpu.memory_space<vmem>>, %arg4: memref<2x128x128xf32, #tpu.memory_space<vmem>>, %arg5: memref<2x1x128xf32, #tpu.memory_space<vmem>>, %arg6: memref<128x128xf32, #tpu.memory_space<vmem>>) attributes {dimension_semantics = [#tpu.dimension_semantics<parallel>], iteration_bounds = array<i64: 2>, scalar_prefetch = 0 : i64, scratch_operands = 0 : i64, tpu.core_type = #tpu.core_type<tc>, window_params = [{transform_indices = @transform_0, window_bounds = array<i64: 128, 128>}, {pipeline_mode = #tpu.pipeline_mode<synchronous>, transform_indices = @transform_1, window_bounds = array<i64: 128, 128>}, {pipeline_mode = #tpu.pipeline_mode<synchronous>, transform_indices = @transform_2, window_bounds = array<i64: 1, 128>}, {pipeline_mode = #tpu.pipeline_mode<synchronous>, transform_indices = @transform_3, window_bounds = array<i64: 2, 128, 128>}, {pipeline_mode = #tpu.pipeline_mode<synchronous>, transform_indices = @transform_4, window_bounds = array<i64: 2, 1, 128>}, {transform_indices = @transform_5, window_bounds = array<i64: 128, 128>}]} {
    %c0 = arith.constant 0 : index
    %c0_0 = arith.constant 0 : index
    %0 = vector.load %arg1[%c0, %c0_0] : memref<128x128xf32, #tpu.memory_space<vmem>>, vector<128x128xf32>
    %c0_1 = arith.constant 0 : index
    %c0_2 = arith.constant 0 : index
    %c0_3 = arith.constant 0 : index
    %1 = vector.load %arg4[%c0_1, %c0_2, %c0_3] : memref<2x128x128xf32, #tpu.memory_space<vmem>>, vector<1x128x128xf32>
    %2 = vector.shape_cast %1 : vector<1x128x128xf32> to vector<128x128xf32>
    %cst = arith.constant dense<0.000000e+00> : vector<128x128xf32>
    %3 = tpu.matmul %0, %2, %cst {dimension_numbers = #tpu.dot_dimension_numbers<[1], [0], [0], [1], [0, 0, 1, 1], [], []>} : vector<128x128xf32>, vector<128x128xf32>, vector<128x128xf32> -> vector<128x128xf32>
    %c0_4 = arith.constant 0 : index
    %c0_5 = arith.constant 0 : index
    %c0_6 = arith.constant 0 : index
    %4 = vector.load %arg5[%c0_4, %c0_5, %c0_6] : memref<2x1x128xf32, #tpu.memory_space<vmem>>, vector<1x1x128xf32>
    %5 = vector.shape_cast %4 : vector<1x1x128xf32> to vector<1x128xf32>
    %6 = vector.broadcast %5 : vector<1x128xf32> to vector<128x128xf32>
    %7 = arith.addf %3, %6 : vector<128x128xf32>
    %cst_7 = arith.constant 0.00999999977 : f32
    %8 = vector.broadcast %cst_7 : f32 to vector<128x128xf32>
    %9 = arith.mulf %8, %7 : vector<128x128xf32>
    %10 = arith.maximumf %7, %9 : vector<128x128xf32>
    %c1 = arith.constant 1 : index
    %c0_8 = arith.constant 0 : index
    %c0_9 = arith.constant 0 : index
    %11 = vector.load %arg4[%c1, %c0_8, %c0_9] : memref<2x128x128xf32, #tpu.memory_space<vmem>>, vector<1x128x128xf32>
    %12 = vector.shape_cast %11 : vector<1x128x128xf32> to vector<128x128xf32>
    %cst_10 = arith.constant dense<0.000000e+00> : vector<128x128xf32>
    %13 = tpu.matmul %10, %12, %cst_10 {dimension_numbers = #tpu.dot_dimension_numbers<[1], [0], [0], [1], [0, 0, 1, 1], [], []>} : vector<128x128xf32>, vector<128x128xf32>, vector<128x128xf32> -> vector<128x128xf32>
    %c1_11 = arith.constant 1 : index
    %c0_12 = arith.constant 0 : index
    %c0_13 = arith.constant 0 : index
    %14 = vector.load %arg5[%c1_11, %c0_12, %c0_13] : memref<2x1x128xf32, #tpu.memory_space<vmem>>, vector<1x1x128xf32>
    %15 = vector.shape_cast %14 : vector<1x1x128xf32> to vector<1x128xf32>
    %16 = vector.broadcast %15 : vector<1x128xf32> to vector<128x128xf32>
    %17 = arith.addf %13, %16 : vector<128x128xf32>
    %cst_14 = arith.constant 0.00999999977 : f32
    %18 = vector.broadcast %cst_14 : f32 to vector<128x128xf32>
    %19 = arith.mulf %18, %17 : vector<128x128xf32>
    %20 = arith.maximumf %17, %19 : vector<128x128xf32>
    %c0_15 = arith.constant 0 : index
    %c0_16 = arith.constant 0 : index
    %21 = vector.load %arg2[%c0_15, %c0_16] : memref<128x128xf32, #tpu.memory_space<vmem>>, vector<128x128xf32>
    %cst_17 = arith.constant dense<0.000000e+00> : vector<128x128xf32>
    %22 = tpu.matmul %0, %21, %cst_17 {dimension_numbers = #tpu.dot_dimension_numbers<[1], [0], [0], [1], [0, 0, 1, 1], [], []>} : vector<128x128xf32>, vector<128x128xf32>, vector<128x128xf32> -> vector<128x128xf32>
    %c0_18 = arith.constant 0 : index
    %c0_19 = arith.constant 0 : index
    %23 = vector.load %arg3[%c0_18, %c0_19] : memref<1x128xf32, #tpu.memory_space<vmem>>, vector<1x128xf32>
    %24 = vector.broadcast %23 : vector<1x128xf32> to vector<128x128xf32>
    %25 = arith.addf %22, %24 : vector<128x128xf32>
    %26 = arith.addf %25, %20 : vector<128x128xf32>
    %c0_20 = arith.constant 0 : index
    %c0_21 = arith.constant 0 : index
    %27 = vector.load %arg6[%c0_20, %c0_21] : memref<128x128xf32, #tpu.memory_space<vmem>>, vector<128x128xf32>
    tpu.vector_store %arg6[%c0_20, %c0_21], %26 {strides = array<i32>} : memref<128x128xf32, #tpu.memory_space<vmem>>, vector<128x128xf32>,
    return
  }
  func.func @transform_0(%arg0: i32) -> (i32, i32) {
    %c0_i32 = arith.constant 0 : i32
    %c0_i32_0 = arith.constant 0 : i32
    return %arg0, %c0_i32 : i32, i32
  }
  func.func @transform_1(%arg0: i32) -> (i32, i32) {
    %c0_i32 = arith.constant 0 : i32
    %c0_i32_0 = arith.constant 0 : i32
    %c0_i32_1 = arith.constant 0 : i32
    return %c0_i32, %c0_i32_0 : i32, i32
  }
  func.func @transform_2(%arg0: i32) -> (i32, i32) {
    %c0_i32 = arith.constant 0 : i32
    %c0_i32_0 = arith.constant 0 : i32
    %c0_i32_1 = arith.constant 0 : i32
    return %c0_i32, %c0_i32_0 : i32, i32
  }
  func.func @transform_3(%arg0: i32) -> (i32, i32, i32) {
    %c0_i32 = arith.constant 0 : i32
    %c0_i32_0 = arith.constant 0 : i32
    %c0_i32_1 = arith.constant 0 : i32
    %c0_i32_2 = arith.constant 0 : i32
    return %c0_i32, %c0_i32_0, %c0_i32_1 : i32, i32, i32
  }
  func.func @transform_4(%arg0: i32) -> (i32, i32, i32) {
    %c0_i32 = arith.constant 0 : i32
    %c0_i32_0 = arith.constant 0 : i32
    %c0_i32_1 = arith.constant 0 : i32
    %c0_i32_2 = arith.constant 0 : i32
    return %c0_i32, %c0_i32_0, %c0_i32_1 : i32, i32, i32
  }
  func.func @transform_5(%arg0: i32) -> (i32, i32) {
    %c0_i32 = arith.constant 0 : i32
    %c0_i32_0 = arith.constant 0 : i32
    return %arg0, %c0_i32 : i32, i32
  }
}

</mosaic_0001>

<llo_original>
// kernel: tpu_custom_call.1
$region0: #{tpu_custom_call.1}
  #allocation0 [shape = 'u32[]', space=smem, size = 0x4, offset = 0x4, fixed_abs, tag = 'smem constant byte address 0x4 - core index']
  #allocation1 [shape = 'u32[72,128]{1,0:T(1,128)}', space=vmem, size = 0x9000, scoped, tag = 'internal scratch']
  %s0 = inlined_call_operand.hbm [shape: f32[256,128], index: 0, kind: input, shape index: {}]
  %s1 = inlined_call_operand.hbm [shape: f32[128,128], index: 1, kind: input, shape index: {}]
  %s2 = inlined_call_operand.vmem [shape: f32[1,128], index: 2, kind: input, shape index: {}]
  %s3 = inlined_call_operand.hbm [shape: f32[2,128,128], index: 3, kind: input, shape index: {}]
  %s4 = inlined_call_operand.vmem [shape: f32[2,1,128], index: 4, kind: input, shape index: {}]
  %s5 = inlined_call_operand.hbm [shape: f32[256,128], index: 5, kind: output, shape index: {}]
  %s6 = sld [smem:[#allocation0]]
  $region65: #{tpu_custom_call.1} parent=0
    _
  %s8 = ssub.s32 1, %s6
  %s9 = scalar_select 0, %s8, %s6
  $region1: #{tpu_custom_call.1} parent=0
    #allocation2 [shape = 'u8[131072]{0}', space=vmem, size = 0x20000, scoped, tag = 'input window, operand 0']
    #allocation3 [shape = 's32[2]{0}', space=sflag, size = 0x8, scoped, tag = 'scoped memory for tpu_custom_call.1']
    #allocation4 [shape = 's32[2]{0}', space=sflag, size = 0x8, scoped, tag = 'scoped memory for tpu_custom_call.1']
    #allocation5 [shape = 'u8[65536]{0}', space=vmem, size = 0x10000, scoped, tag = 'input window, operand 1, single buffered']
    #allocation6 [shape = 's32[1]{0}', space=sflag, size = 0x4, scoped, tag = 'scoped memory for tpu_custom_call.1']
    #allocation7 [shape = 'u8[131072]{0}', space=vmem, size = 0x20000, scoped, tag = 'input window, operand 3, single buffered']
    #allocation8 [shape = 'u8[131072]{0}', space=vmem, size = 0x20000, scoped, tag = 'output window, operand 0']
    %10 = vsyncpa [#allocation3], 0
    %s11 = scalar_lea.sflag [#allocation3], 1
    %12 = vsyncpa %s11, 0
    %13 = vsyncpa [#allocation6], 0
    %14 = vsyncpa [#allocation4], 0
    %s15 = scalar_lea.sflag [#allocation4], 1
    %16 = vsyncpa %s15, 0
    loop: start=0, step=1, limit=4
    $region2: #{tpu_custom_call.1} parent=1 // loop_pre_header
      _
    $region3: #{tpu_custom_call.1} parent=1 // loop_header
      %s18 = sphi 0, %s22
      %p19 = scmp.ge.s32.totalorder %s18, 4
      %s28 = sphi 0, %s30
      %s31 = sphi 0, %s28
      %s32 = sphi 0, %s31
      %s48 = sphi 0, %s32
      %s52 = sphi 0, %s52
      %s54 = sphi 0, %s52
      %s55 = sphi 0, %s54
      %s69 = sphi 0, %s55
      %s73 = sphi 0, %s73
      %s75 = sphi 0, %s73
      %s76 = sphi 0, %s75
      %s90 = sphi 0, %s76
      %s94 = sphi 0, %s94
      %s96 = sphi 0, %s94
      %s97 = sphi 0, %s96
      %s111 = sphi 0, %s97
      %s115 = sphi 0, %s115
      %s117 = sphi 0, %s115
      %s118 = sphi 0, %s117
      %s132 = sphi 0, %s118
      %s138 = sphi 0, %s140
      %s141 = sphi 0, %s138
      %s142 = sphi 0, %s141
      %s158 = sphi 0, %s142
    $region4: #{tpu_custom_call.1} parent=1 // loop_header_branch
      %21 = sbr.rel (%p19) target = $region8
    $region5: #{tpu_custom_call.1} parent=1 // loop_body
      %s23 = ssub.s32 %s18, 1
      %s24 = ssub.s32 %s18, 2
      %s25 = sadd.s32 %s18, 1
      %s26 = ssub.s32 %s18, %s25
      %p27 = scmp.eq.s32.totalorder %s26, 0
      %s29 = sadd.s32 %s28, 1
      %s30 = scalar_select %p27, %s28, %s29
      %p33 = pneg %p27
      %p34 = scmp.eq.s32.totalorder %s18, 1
      %p35 = por %p33, %p34
      %p36 = scmp.ne.s32.totalorder %s28, %s31
      %p37 = scmp.eq.s32.totalorder %s18, 0
      %p38 = por %p36, %p37
      %p39 = scmp.ne.s32.totalorder %s28, %s31
      %p40 = scmp.eq.s32.totalorder %s23, 1
      %p41 = por %p39, %p40
      %p42 = scmp.ne.s32.totalorder %s31, %s32
      %p43 = scmp.eq.s32.totalorder %s23, 0
      %p44 = por %p42, %p43
      %p45 = scmp.ne.s32.totalorder %s31, %s32
      %p46 = scmp.eq.s32.totalorder %s24, 1
      %p47 = por %p45, %p46
      %p49 = scmp.ne.s32.totalorder %s32, %s48
      %p50 = scmp.eq.s32.totalorder %s24, 0
      %p51 = por %p49, %p50
      %s53 = sadd.s32 %s52, 1
      %p56 = scmp.eq.s32.totalorder %s18, 1
      %p57 = scmp.ne.s32.totalorder %s52, %s54
      %p58 = scmp.eq.s32.totalorder %s18, 0
      %p59 = por %p57, %p58
      %p60 = scmp.ne.s32.totalorder %s52, %s54
      %p61 = scmp.eq.s32.totalorder %s23, 1
      %p62 = por %p60, %p61
      %p63 = scmp.ne.s32.totalorder %s54, %s55
      %p64 = scmp.eq.s32.totalorder %s23, 0
      %p65 = por %p63, %p64
      %p66 = scmp.ne.s32.totalorder %s54, %s55
      %p67 = scmp.eq.s32.totalorder %s24, 1
      %p68 = por %p66, %p67
      %p70 = scmp.ne.s32.totalorder %s55, %s69
      %p71 = scmp.eq.s32.totalorder %s24, 0
      %p72 = por %p70, %p71
      %s74 = sadd.s32 %s73, 1
      %p77 = scmp.eq.s32.totalorder %s18, 1
      %p78 = scmp.ne.s32.totalorder %s73, %s75
      %p79 = scmp.eq.s32.totalorder %s18, 0
      %p80 = por %p78, %p79
      %p81 = scmp.ne.s32.totalorder %s73, %s75
      %p82 = scmp.eq.s32.totalorder %s23, 1
      %p83 = por %p81, %p82
      %p84 = scmp.ne.s32.totalorder %s75, %s76
      %p85 = scmp.eq.s32.totalorder %s23, 0
      %p86 = por %p84, %p85
      %p87 = scmp.ne.s32.totalorder %s75, %s76
      %p88 = scmp.eq.s32.totalorder %s24, 1
      %p89 = por %p87, %p88
      %p91 = scmp.ne.s32.totalorder %s76, %s90
      %p92 = scmp.eq.s32.totalorder %s24, 0
      %p93 = por %p91, %p92
      %s95 = sadd.s32 %s94, 1
      %p98 = scmp.eq.s32.totalorder %s18, 1
      %p99 = scmp.ne.s32.totalorder %s94, %s96
      %p100 = scmp.eq.s32.totalorder %s18, 0
      %p101 = por %p99, %p100
      %p102 = scmp.ne.s32.totalorder %s94, %s96
      %p103 = scmp.eq.s32.totalorder %s23, 1
      %p104 = por %p102, %p103
      %p105 = scmp.ne.s32.totalorder %s96, %s97
      %p106 = scmp.eq.s32.totalorder %s23, 0
      %p107 = por %p105, %p106
      %p108 = scmp.ne.s32.totalorder %s96, %s97
      %p109 = scmp.eq.s32.totalorder %s24, 1
      %p110 = por %p108, %p109
      %p112 = scmp.ne.s32.totalorder %s97, %s111
      %p113 = scmp.eq.s32.totalorder %s24, 0
      %p114 = por %p112, %p113
      %s116 = sadd.s32 %s115, 1
      %p119 = scmp.eq.s32.totalorder %s18, 1
      %p120 = scmp.ne.s32.totalorder %s115, %s117
      %p121 = scmp.eq.s32.totalorder %s18, 0
      %p122 = por %p120, %p121
      %p123 = scmp.ne.s32.totalorder %s115, %s117
      %p124 = scmp.eq.s32.totalorder %s23, 1
      %p125 = por %p123, %p124
      %p126 = scmp.ne.s32.totalorder %s117, %s118
      %p127 = scmp.eq.s32.totalorder %s23, 0
      %p128 = por %p126, %p127
      %p129 = scmp.ne.s32.totalorder %s117, %s118
      %p130 = scmp.eq.s32.totalorder %s24, 1
      %p131 = por %p129, %p130
      %p133 = scmp.ne.s32.totalorder %s118, %s132
      %p134 = scmp.eq.s32.totalorder %s24, 0
      %p135 = por %p133, %p134
      %s136 = ssub.s32 %s18, %s25
      %p137 = scmp.eq.s32.totalorder %s136, 0
      %s139 = sadd.s32 %s138, 1
      %s140 = scalar_select %p137, %s138, %s139
      %p143 = pneg %p137
      %p144 = scmp.eq.s32.totalorder %s18, 1
      %p145 = por %p143, %p144
      %p146 = scmp.ne.s32.totalorder %s138, %s141
      %p147 = scmp.eq.s32.totalorder %s18, 0
      %p148 = por %p146, %p147
      %p149 = scmp.ne.s32.totalorder %s138, %s141
      %p150 = scmp.eq.s32.totalorder %s23, 1
      %p151 = por %p149, %p150
      %p152 = scmp.ne.s32.totalorder %s141, %s142
      %p153 = scmp.eq.s32.totalorder %s23, 0
      %p154 = por %p152, %p153
      %p155 = scmp.ne.s32.totalorder %s141, %s142
      %p156 = scmp.eq.s32.totalorder %s24, 1
      %p157 = por %p155, %p156
      %p159 = scmp.ne.s32.totalorder %s142, %s158
      %p160 = scmp.eq.s32.totalorder %s24, 0
      %p161 = por %p159, %p160
      %p162 = scmp.le.s32.totalorder 1, %s18
      %p163 = scmp.lt.s32.totalorder %s18, 3
      %p164 = pnand %p162, %p163
      %p165 = pneg %p164
      // Predicated region
      $region9: #{tpu_custom_call.1} parent=5 // pred_check
        _
      $region10: #{tpu_custom_call.1} parent=5 // pred_check_branch
        %167 = sbr.rel (%p164) target = $region12
      $region11: #{tpu_custom_call.1} parent=5 // pred_region
        %s168 = ssub.s32 %s18, 1
        // Predicated region
        $region13: #{tpu_custom_call.1} parent=11 // pred_check
          %p169 = pneg %p65
        $region14: #{tpu_custom_call.1} parent=11 // pred_check_branch
          %171 = sbr.rel (%p169) target = $region16
        $region15: #{tpu_custom_call.1} parent=11 // pred_region
          %173 = vsyncadd [#allocation6], 0
          %s174 = sshll.u32 %s1, 4
          %s175 = int_to_ptr.hbm [resolvable:$true] %s174
          %s176 = sshll.u32 [#allocation5], 4
          %s177 = int_to_ptr.vmem [resolvable:$true] %s176
          %182 = dma.hbm_to_vmem [thread:$0]  %s175, 2048, %s177, [#allocation6], 128, 128, 8
        $region16: #{tpu_custom_call.1} parent=11 // pred_fallthru
          _
        // Predicated region
        $region17: #{tpu_custom_call.1} parent=11 // pred_check
          %p183 = pneg %p86
        $region18: #{tpu_custom_call.1} parent=11 // pred_check_branch
          %185 = sbr.rel (%p183) target = $region20
        $region19: #{tpu_custom_call.1} parent=11 // pred_region
          _
        $region20: #{tpu_custom_call.1} parent=11 // pred_fallthru
          _
        // Predicated region
        $region21: #{tpu_custom_call.1} parent=11 // pred_check
          %p186 = pneg %p107
        $region22: #{tpu_custom_call.1} parent=11 // pred_check_branch
          %188 = sbr.rel (%p186) target = $region24
        $region23: #{tpu_custom_call.1} parent=11 // pred_region
          %190 = vsyncadd [#allocation6], 0
          %s191 = sshll.u32 %s3, 4
          %s192 = int_to_ptr.hbm [resolvable:$true] %s191
          %s193 = sshll.u32 [#allocation7], 4
          %s194 = int_to_ptr.vmem [resolvable:$true] %s193
          %199 = dma.hbm_to_vmem [thread:$0]  %s192, 4096, %s194, [#allocation6], 128, 128, 8
        $region24: #{tpu_custom_call.1} parent=11 // pred_fallthru
          _
        // Predicated region
        $region25: #{tpu_custom_call.1} parent=11 // pred_check
          %p200 = pneg %p128
        $region26: #{tpu_custom_call.1} parent=11 // pred_check_branch
          %202 = sbr.rel (%p200) target = $region28
        $region27: #{tpu_custom_call.1} parent=11 // pred_region
          _
        $region28: #{tpu_custom_call.1} parent=11 // pred_fallthru
          _
      $region12: #{tpu_custom_call.1} parent=5 // pred_fallthru
        _
      %p203 = scmp.lt.s32.totalorder %s18, 2
      // Predicated region
      $region29: #{tpu_custom_call.1} parent=5 // pred_check
        %p204 = pneg %p203
      $region30: #{tpu_custom_call.1} parent=5 // pred_check_branch
        %206 = sbr.rel (%p204) target = $region32
      $region31: #{tpu_custom_call.1} parent=5 // pred_region
        // Predicated region
        $region33: #{tpu_custom_call.1} parent=31 // pred_check
          %p207 = pneg %p38
        $region34: #{tpu_custom_call.1} parent=31 // pred_check_branch
          %209 = sbr.rel (%p207) target = $region36
        $region35: #{tpu_custom_call.1} parent=31 // pred_region
          %s210 = sand.u32 %s28, 1
          %s211 = scalar_lea.sflag [#allocation3], %s210
          %s212 = sand.u32 %s28, 1
          %s213 = smul.addr %s212, 128
          %s214 = scalar_lea.vmem [#allocation2], %s213
          %s215 = smul.u32 16, %s18
          %217 = vsyncadd %s211, 0
          %s218 = smul.addr %s215, 8
          %s219 = scalar_lea.hbm %s0, %s218
          %s220 = sshll.u32 %s219, 4
          %s221 = int_to_ptr.hbm [resolvable:$true] %s220
          %s222 = sshll.u32 %s214, 4
          %s223 = int_to_ptr.vmem [resolvable:$true] %s222
          %228 = dma.hbm_to_vmem [thread:$0]  %s221, 2048, %s223, %s211, 128, 128, 8
        $region36: #{tpu_custom_call.1} parent=31 // pred_fallthru
          _
      $region32: #{tpu_custom_call.1} parent=5 // pred_fallthru
        _
      %p229 = scmp.le.s32.totalorder 1, %s18
      %p230 = scmp.lt.s32.totalorder %s18, 3
      %p231 = pnand %p229, %p230
      %p232 = pneg %p231
      // Predicated region
      $region37: #{tpu_custom_call.1} parent=5 // pred_check
        _
      $region38: #{tpu_custom_call.1} parent=5 // pred_check_branch
        %234 = sbr.rel (%p231) target = $region40
      $region39: #{tpu_custom_call.1} parent=5 // pred_region
        %s235 = ssub.s32 %s18, 1
        %s236 = sand.u32 %s31, 1
        %s237 = scalar_lea.sflag [#allocation3], %s236
        %s238 = sand.u32 %s31, 1
        %s239 = smul.addr %s238, 128
        %s240 = scalar_lea.vmem [#allocation2], %s239
        // Predicated region
        $region41: #{tpu_custom_call.1} parent=39 // pred_check
          %p241 = pneg %p44
        $region42: #{tpu_custom_call.1} parent=39 // pred_check_branch
          %243 = sbr.rel (%p241) target = $region44
        $region43: #{tpu_custom_call.1} parent=39 // pred_region
          %245 = dma.done %s237, 2048
        $region44: #{tpu_custom_call.1} parent=39 // pred_fallthru
          _
        // Predicated region
        $region45: #{tpu_custom_call.1} parent=39 // pred_check
          %p246 = pneg %p65
        $region46: #{tpu_custom_call.1} parent=39 // pred_check_branch
          %248 = sbr.rel (%p246) target = $region48
        $region47: #{tpu_custom_call.1} parent=39 // pred_region
          %250 = dma.done [#allocation6], 2048
        $region48: #{tpu_custom_call.1} parent=39 // pred_fallthru
          _
        // Predicated region
        $region49: #{tpu_custom_call.1} parent=39 // pred_check
          %p251 = pneg %p107
        $region50: #{tpu_custom_call.1} parent=39 // pred_check_branch
          %253 = sbr.rel (%p251) target = $region52
        $region51: #{tpu_custom_call.1} parent=39 // pred_region
          %255 = dma.done [#allocation6], 4096
        $region52: #{tpu_custom_call.1} parent=39 // pred_fallthru
          _
        %s256 = sand.u32 %s31, 1
        %s257 = scalar_lea.sflag [#allocation3], %s256
        %s258 = sand.u32 %s31, 1
        %s259 = smul.addr %s258, 128
        %s260 = scalar_lea.vmem [#allocation2], %s259
        %p261 = pneg %p44
        %p262 = pneg %p41
        %p263 = pneg %p65
        %p264 = pneg %p62
        %p265 = pneg %p86
        %p266 = pneg %p83
        %p267 = pneg %p107
        %p268 = pneg %p104
        %p269 = pneg %p128
        %p270 = pneg %p125
        %p271 = pneg %p154
        %p272 = pneg %p151
        %s273 = sand.u32 %s141, 1
        %s274 = scalar_lea.sflag [#allocation4], %s273
        %s275 = sand.u32 %s141, 1
        %s276 = smul.addr %s275, 128
        %s277 = scalar_lea.vmem [#allocation8], %s276
        %s278 = smul.u32 16, %s23
        %s279 = smul.u32 16, %s23
        %v280 = vld [vmem:[%s240] sm:$0xff]
        %v281 = vld [vmem:[%s240 + $0x8] sm:$0xff]
        %v282 = vld [vmem:[%s240 + $0x10] sm:$0xff]
        %v283 = vld [vmem:[%s240 + $0x18] sm:$0xff]
        %v284 = vld [vmem:[%s240 + $0x20] sm:$0xff]
        %v285 = vld [vmem:[%s240 + $0x28] sm:$0xff]
        %v286 = vld [vmem:[%s240 + $0x30] sm:$0xff]
        %v287 = vld [vmem:[%s240 + $0x38] sm:$0xff]
        %v288 = vld [vmem:[%s240 + $0x40] sm:$0xff]
        %v289 = vld [vmem:[%s240 + $0x48] sm:$0xff]
        %v290 = vld [vmem:[%s240 + $0x50] sm:$0xff]
        %v291 = vld [vmem:[%s240 + $0x58] sm:$0xff]
        %v292 = vld [vmem:[%s240 + $0x60] sm:$0xff]
        %v293 = vld [vmem:[%s240 + $0x68] sm:$0xff]
        %v294 = vld [vmem:[%s240 + $0x70] sm:$0xff]
        %v295 = vld [vmem:[%s240 + $0x78] sm:$0xff]
        %v296 = vld [vmem:[#allocation7] sm:$0xff]
        %v297 = vld [vmem:[#allocation7 + $0x8] sm:$0xff]
        %v298 = vld [vmem:[#allocation7 + $0x10] sm:$0xff]
        %v299 = vld [vmem:[#allocation7 + $0x18] sm:$0xff]
        %v300 = vld [vmem:[#allocation7 + $0x20] sm:$0xff]
        %v301 = vld [vmem:[#allocation7 + $0x28] sm:$0xff]
        %v302 = vld [vmem:[#allocation7 + $0x30] sm:$0xff]
        %v303 = vld [vmem:[#allocation7 + $0x38] sm:$0xff]
        %v304 = vld [vmem:[#allocation7 + $0x40] sm:$0xff]
        %v305 = vld [vmem:[#allocation7 + $0x48] sm:$0xff]
        %v306 = vld [vmem:[#allocation7 + $0x50] sm:$0xff]
        %v307 = vld [vmem:[#allocation7 + $0x58] sm:$0xff]
        %v308 = vld [vmem:[#allocation7 + $0x60] sm:$0xff]
        %v309 = vld [vmem:[#allocation7 + $0x68] sm:$0xff]
        %v310 = vld [vmem:[#allocation7 + $0x70] sm:$0xff]
        %v311 = vld [vmem:[#allocation7 + $0x78] sm:$0xff]
        %v312 = vld [vmem:[%s4] sm:$0x1]
        %v314 = vperm.slane %v312, 0
        %316 = vmatpush.msra.mxu0 %v311
        %317 = vmatpush.msra.mxu0 %v310
        %318 = vmatpush.msra.mxu0 %v309
        %319 = vmatpush.msra.mxu0 %v308
        %320 = vmatpush.msra.mxu0 %v307
        %321 = vmatpush.msra.mxu0 %v306
        %322 = vmatpush.msra.mxu0 %v305
        %323 = vmatpush.msra.mxu0 %v304
        %324 = vmatpush.msra.mxu0 %v303
        %325 = vmatpush.msra.mxu0 %v302
        %326 = vmatpush.msra.mxu0 %v301
        %327 = vmatpush.msra.mxu0 %v300
        %328 = vmatpush.msra.mxu0 %v299
        %329 = vmatpush.msra.mxu0 %v298
        %330 = vmatpush.msra.mxu0 %v297
        %331 = vmatpush.msra.mxu0 %v296
        %332 = vmatmul.f32.gmra.mxu0 %v280
        %v333 = vpop.f32.mrf.mxu0
        %v334 = vadd.f32 %v314, %v333
        %335 = vmatmul.f32.gmra.mxu0 %v281
        %v336 = vpop.f32.mrf.mxu0
        %v337 = vadd.f32 %v314, %v336
        %338 = vmatmul.f32.gmra.mxu0 %v282
        %v339 = vpop.f32.mrf.mxu0
        %v340 = vadd.f32 %v314, %v339
        %341 = vmatmul.f32.gmra.mxu0 %v283
        %v342 = vpop.f32.mrf.mxu0
        %v343 = vadd.f32 %v314, %v342
        %344 = vmatmul.f32.gmra.mxu0 %v284
        %v345 = vpop.f32.mrf.mxu0
        %v346 = vadd.f32 %v314, %v345
        %347 = vmatmul.f32.gmra.mxu0 %v285
        %v348 = vpop.f32.mrf.mxu0
        %v349 = vadd.f32 %v314, %v348
        %350 = vmatmul.f32.gmra.mxu0 %v286
        %v351 = vpop.f32.mrf.mxu0
        %v352 = vadd.f32 %v314, %v351
        %353 = vmatmul.f32.gmra.mxu0 %v287
        %v354 = vpop.f32.mrf.mxu0
        %v355 = vadd.f32 %v314, %v354
        %356 = vmatmul.f32.gmra.mxu0 %v288
        %v357 = vpop.f32.mrf.mxu0
        %v358 = vadd.f32 %v314, %v357
        %359 = vmatmul.f32.gmra.mxu0 %v289
        %v360 = vpop.f32.mrf.mxu0
        %v361 = vadd.f32 %v314, %v360
        %362 = vmatmul.f32.gmra.mxu0 %v290
        %v363 = vpop.f32.mrf.mxu0
        %v364 = vadd.f32 %v314, %v363
        %365 = vmatmul.f32.gmra.mxu0 %v291
        %v366 = vpop.f32.mrf.mxu0
        %v367 = vadd.f32 %v314, %v366
        %368 = vmatmul.f32.gmra.mxu0 %v292
        %v369 = vpop.f32.mrf.mxu0
        %v370 = vadd.f32 %v314, %v369
        %371 = vmatmul.f32.gmra.mxu0 %v293
        %v372 = vpop.f32.mrf.mxu0
        %v373 = vadd.f32 %v314, %v372
        %374 = vmatmul.f32.gmra.mxu0 %v294
        %v375 = vpop.f32.mrf.mxu0
        %v376 = vadd.f32 %v314, %v375
        %377 = vmatmul.f32.gmra.mxu0 %v295
        %v378 = vpop.f32.mrf.mxu0
        %v379 = vadd.f32 %v314, %v378
        %380 = vdwg.mxu0
        %v381 = vmul.f32 %v334, 0.01
        %v382 = vmul.f32 %v337, 0.01
        %v383 = vmul.f32 %v340, 0.01
        %v384 = vmul.f32 %v343, 0.01
        %v385 = vmul.f32 %v346, 0.01
        %v386 = vmul.f32 %v349, 0.01
        %v387 = vmul.f32 %v352, 0.01
        %v388 = vmul.f32 %v355, 0.01
        %v389 = vmul.f32 %v358, 0.01
        %v390 = vmul.f32 %v361, 0.01
        %v391 = vmul.f32 %v364, 0.01
        %v392 = vmul.f32 %v367, 0.01
        %v393 = vmul.f32 %v370, 0.01
        %v394 = vmul.f32 %v373, 0.01
        %v395 = vmul.f32 %v376, 0.01
        %v396 = vmul.f32 %v379, 0.01
        %v397 = vmax.f32 %v334, %v381
        %v398 = vmax.f32 %v337, %v382
        %v399 = vmax.f32 %v340, %v383
        %v400 = vmax.f32 %v343, %v384
        %v401 = vmax.f32 %v346, %v385
        %v402 = vmax.f32 %v349, %v386
        %v403 = vmax.f32 %v352, %v387
        %v404 = vmax.f32 %v355, %v388
        %v405 = vmax.f32 %v358, %v389
        %v406 = vmax.f32 %v361, %v390
        %v407 = vmax.f32 %v364, %v391
        %v408 = vmax.f32 %v367, %v392
        %v409 = vmax.f32 %v370, %v393
        %v410 = vmax.f32 %v373, %v394
        %v411 = vmax.f32 %v376, %v395
        %v412 = vmax.f32 %v379, %v396
        %s413 = scalar_lea.vmem [#allocation7], 128
        %v414 = vld [vmem:[%s413] sm:$0xff]
        %v415 = vld [vmem:[%s413 + $0x8] sm:$0xff]
        %v416 = vld [vmem:[%s413 + $0x10] sm:$0xff]
        %v417 = vld [vmem:[%s413 + $0x18] sm:$0xff]
        %v418 = vld [vmem:[%s413 + $0x20] sm:$0xff]
        %v419 = vld [vmem:[%s413 + $0x28] sm:$0xff]
        %v420 = vld [vmem:[%s413 + $0x30] sm:$0xff]
        %v421 = vld [vmem:[%s413 + $0x38] sm:$0xff]
        %v422 = vld [vmem:[%s413 + $0x40] sm:$0xff]
        %v423 = vld [vmem:[%s413 + $0x48] sm:$0xff]
        %v424 = vld [vmem:[%s413 + $0x50] sm:$0xff]
        %v425 = vld [vmem:[%s413 + $0x58] sm:$0xff]
        %v426 = vld [vmem:[%s413 + $0x60] sm:$0xff]
        %v427 = vld [vmem:[%s413 + $0x68] sm:$0xff]
        %v428 = vld [vmem:[%s413 + $0x70] sm:$0xff]
        %v429 = vld [vmem:[%s413 + $0x78] sm:$0xff]
        %s430 = scalar_lea.vmem %s4, 1
        %v431 = vld [vmem:[%s430] sm:$0x1]
        %v433 = vperm.slane %v431, 0
        %435 = vmatpush.msra.mxu0 %v429
        %436 = vmatpush.msra.mxu0 %v428
        %437 = vmatpush.msra.mxu0 %v427
        %438 = vmatpush.msra.mxu0 %v426
        %439 = vmatpush.msra.mxu0 %v425
        %440 = vmatpush.msra.mxu0 %v424
        %441 = vmatpush.msra.mxu0 %v423
        %442 = vmatpush.msra.mxu0 %v422
        %443 = vmatpush.msra.mxu0 %v421
        %444 = vmatpush.msra.mxu0 %v420
        %445 = vmatpush.msra.mxu0 %v419
        %446 = vmatpush.msra.mxu0 %v418
        %447 = vmatpush.msra.mxu0 %v417
        %448 = vmatpush.msra.mxu0 %v416
        %449 = vmatpush.msra.mxu0 %v415
        %450 = vmatpush.msra.mxu0 %v414
        %451 = vmatmul.f32.gmra.mxu0 %v397
        %v452 = vpop.f32.mrf.mxu0
        %v453 = vadd.f32 %v433, %v452
        %454 = vmatmul.f32.gmra.mxu0 %v398
        %v455 = vpop.f32.mrf.mxu0
        %v456 = vadd.f32 %v433, %v455
        %457 = vmatmul.f32.gmra.mxu0 %v399
        %v458 = vpop.f32.mrf.mxu0
        %v459 = vadd.f32 %v433, %v458
        %460 = vmatmul.f32.gmra.mxu0 %v400
        %v461 = vpop.f32.mrf.mxu0
        %v462 = vadd.f32 %v433, %v461
        %463 = vmatmul.f32.gmra.mxu0 %v401
        %v464 = vpop.f32.mrf.mxu0
        %v465 = vadd.f32 %v433, %v464
        %466 = vmatmul.f32.gmra.mxu0 %v402
        %v467 = vpop.f32.mrf.mxu0
        %v468 = vadd.f32 %v433, %v467
        %469 = vmatmul.f32.gmra.mxu0 %v403
        %v470 = vpop.f32.mrf.mxu0
        %v471 = vadd.f32 %v433, %v470
        %472 = vmatmul.f32.gmra.mxu0 %v404
        %v473 = vpop.f32.mrf.mxu0
        %v474 = vadd.f32 %v433, %v473
        %475 = vmatmul.f32.gmra.mxu0 %v405
        %v476 = vpop.f32.mrf.mxu0
        %v477 = vadd.f32 %v433, %v476
        %478 = vmatmul.f32.gmra.mxu0 %v406
        %v479 = vpop.f32.mrf.mxu0
        %v480 = vadd.f32 %v433, %v479
        %481 = vmatmul.f32.gmra.mxu0 %v407
        %v482 = vpop.f32.mrf.mxu0
        %v483 = vadd.f32 %v433, %v482
        %484 = vmatmul.f32.gmra.mxu0 %v408
        %v485 = vpop.f32.mrf.mxu0
        %v486 = vadd.f32 %v433, %v485
        %487 = vmatmul.f32.gmra.mxu0 %v409
        %v488 = vpop.f32.mrf.mxu0
        %v489 = vadd.f32 %v433, %v488
        %490 = vmatmul.f32.gmra.mxu0 %v410
        %v491 = vpop.f32.mrf.mxu0
        %v492 = vadd.f32 %v433, %v491
        %493 = vmatmul.f32.gmra.mxu0 %v411
        %v494 = vpop.f32.mrf.mxu0
        %v495 = vadd.f32 %v433, %v494
        %496 = vmatmul.f32.gmra.mxu0 %v412
        %v497 = vpop.f32.mrf.mxu0
        %v498 = vadd.f32 %v433, %v497
        %499 = vdwg.mxu0
        %v500 = vmul.f32 %v453, 0.01
        %v501 = vmul.f32 %v456, 0.01
        %v502 = vmul.f32 %v459, 0.01
        %v503 = vmul.f32 %v462, 0.01
        %v504 = vmul.f32 %v465, 0.01
        %v505 = vmul.f32 %v468, 0.01
        %v506 = vmul.f32 %v471, 0.01
        %v507 = vmul.f32 %v474, 0.01
        %v508 = vmul.f32 %v477, 0.01
        %v509 = vmul.f32 %v480, 0.01
        %v510 = vmul.f32 %v483, 0.01
        %v511 = vmul.f32 %v486, 0.01
        %v512 = vmul.f32 %v489, 0.01
        %v513 = vmul.f32 %v492, 0.01
        %v514 = vmul.f32 %v495, 0.01
        %v515 = vmul.f32 %v498, 0.01
        %v516 = vmax.f32 %v453, %v500
        %v517 = vmax.f32 %v456, %v501
        %v518 = vmax.f32 %v459, %v502
        %v519 = vmax.f32 %v462, %v503
        %v520 = vmax.f32 %v465, %v504
        %v521 = vmax.f32 %v468, %v505
        %v522 = vmax.f32 %v471, %v506
        %v523 = vmax.f32 %v474, %v507
        %v524 = vmax.f32 %v477, %v508
        %v525 = vmax.f32 %v480, %v509
        %v526 = vmax.f32 %v483, %v510
        %v527 = vmax.f32 %v486, %v511
        %v528 = vmax.f32 %v489, %v512
        %v529 = vmax.f32 %v492, %v513
        %v530 = vmax.f32 %v495, %v514
        %v531 = vmax.f32 %v498, %v515
        %v532 = vld [vmem:[#allocation5] sm:$0xff]
        %v533 = vld [vmem:[#allocation5 + $0x8] sm:$0xff]
        %v534 = vld [vmem:[#allocation5 + $0x10] sm:$0xff]
        %v535 = vld [vmem:[#allocation5 + $0x18] sm:$0xff]
        %v536 = vld [vmem:[#allocation5 + $0x20] sm:$0xff]
        %v537 = vld [vmem:[#allocation5 + $0x28] sm:$0xff]
        %v538 = vld [vmem:[#allocation5 + $0x30] sm:$0xff]
        %v539 = vld [vmem:[#allocation5 + $0x38] sm:$0xff]
        %v540 = vld [vmem:[#allocation5 + $0x40] sm:$0xff]
        %v541 = vld [vmem:[#allocation5 + $0x48] sm:$0xff]
        %v542 = vld [vmem:[#allocation5 + $0x50] sm:$0xff]
        %v543 = vld [vmem:[#allocation5 + $0x58] sm:$0xff]
        %v544 = vld [vmem:[#allocation5 + $0x60] sm:$0xff]
        %v545 = vld [vmem:[#allocation5 + $0x68] sm:$0xff]
        %v546 = vld [vmem:[#allocation5 + $0x70] sm:$0xff]
        %v547 = vld [vmem:[#allocation5 + $0x78] sm:$0xff]
        %v548 = vld [vmem:[%s2] sm:$0x1]
        %v550 = vperm.slane %v548, 0
        %552 = vmatpush.msra.mxu0 %v547
        %553 = vmatpush.msra.mxu0 %v546
        %554 = vmatpush.msra.mxu0 %v545
        %555 = vmatpush.msra.mxu0 %v544
        %556 = vmatpush.msra.mxu0 %v543
        %557 = vmatpush.msra.mxu0 %v542
        %558 = vmatpush.msra.mxu0 %v541
        %559 = vmatpush.msra.mxu0 %v540
        %560 = vmatpush.msra.mxu0 %v539
        %561 = vmatpush.msra.mxu0 %v538
        %562 = vmatpush.msra.mxu0 %v537
        %563 = vmatpush.msra.mxu0 %v536
        %564 = vmatpush.msra.mxu0 %v535
        %565 = vmatpush.msra.mxu0 %v534
        %566 = vmatpush.msra.mxu0 %v533
        %567 = vmatpush.msra.mxu0 %v532
        %568 = vmatmul.f32.gmra.mxu0 %v280
        %v569 = vpop.f32.mrf.mxu0
        %v570 = vadd.f32 %v550, %v569
        %571 = vmatmul.f32.gmra.mxu0 %v281
        %v572 = vpop.f32.mrf.mxu0
        %v573 = vadd.f32 %v550, %v572
        %574 = vmatmul.f32.gmra.mxu0 %v282
        %v575 = vpop.f32.mrf.mxu0
        %v576 = vadd.f32 %v550, %v575
        %577 = vmatmul.f32.gmra.mxu0 %v283
        %v578 = vpop.f32.mrf.mxu0
        %v579 = vadd.f32 %v550, %v578
        %580 = vmatmul.f32.gmra.mxu0 %v284
        %v581 = vpop.f32.mrf.mxu0
        %v582 = vadd.f32 %v550, %v581
        %583 = vmatmul.f32.gmra.mxu0 %v285
        %v584 = vpop.f32.mrf.mxu0
        %v585 = vadd.f32 %v550, %v584
        %586 = vmatmul.f32.gmra.mxu0 %v286
        %v587 = vpop.f32.mrf.mxu0
        %v588 = vadd.f32 %v550, %v587
        %589 = vmatmul.f32.gmra.mxu0 %v287
        %v590 = vpop.f32.mrf.mxu0
        %v591 = vadd.f32 %v550, %v590
        %592 = vmatmul.f32.gmra.mxu0 %v288
        %v593 = vpop.f32.mrf.mxu0
        %v594 = vadd.f32 %v550, %v593
        %595 = vmatmul.f32.gmra.mxu0 %v289
        %v596 = vpop.f32.mrf.mxu0
        %v597 = vadd.f32 %v550, %v596
        %598 = vmatmul.f32.gmra.mxu0 %v290
        %v599 = vpop.f32.mrf.mxu0
        %v600 = vadd.f32 %v550, %v599
        %601 = vmatmul.f32.gmra.mxu0 %v291
        %v602 = vpop.f32.mrf.mxu0
        %v603 = vadd.f32 %v550, %v602
        %604 = vmatmul.f32.gmra.mxu0 %v292
        %v605 = vpop.f32.mrf.mxu0
        %v606 = vadd.f32 %v550, %v605
        %607 = vmatmul.f32.gmra.mxu0 %v293
        %v608 = vpop.f32.mrf.mxu0
        %v609 = vadd.f32 %v550, %v608
        %610 = vmatmul.f32.gmra.mxu0 %v294
        %v611 = vpop.f32.mrf.mxu0
        %v612 = vadd.f32 %v550, %v611
        %613 = vmatmul.f32.gmra.mxu0 %v295
        %v614 = vpop.f32.mrf.mxu0
        %v615 = vadd.f32 %v550, %v614
        %616 = vdwg.mxu0
        %v617 = vadd.f32 %v570, %v516
        %v618 = vadd.f32 %v573, %v517
        %v619 = vadd.f32 %v576, %v518
        %v620 = vadd.f32 %v579, %v519
        %v621 = vadd.f32 %v582, %v520
        %v622 = vadd.f32 %v585, %v521
        %v623 = vadd.f32 %v588, %v522
        %v624 = vadd.f32 %v591, %v523
        %v625 = vadd.f32 %v594, %v524
        %v626 = vadd.f32 %v597, %v525
        %v627 = vadd.f32 %v600, %v526
        %v628 = vadd.f32 %v603, %v527
        %v629 = vadd.f32 %v606, %v528
        %v630 = vadd.f32 %v609, %v529
        %v631 = vadd.f32 %v612, %v530
        %v632 = vadd.f32 %v615, %v531
        %633 = vst [vmem:[%s277] sm:$0xff] %v617
        %634 = vst [vmem:[%s277 + $0x8] sm:$0xff] %v618
        %635 = vst [vmem:[%s277 + $0x10] sm:$0xff] %v619
        %636 = vst [vmem:[%s277 + $0x18] sm:$0xff] %v620
        %637 = vst [vmem:[%s277 + $0x20] sm:$0xff] %v621
        %638 = vst [vmem:[%s277 + $0x28] sm:$0xff] %v622
        %639 = vst [vmem:[%s277 + $0x30] sm:$0xff] %v623
        %640 = vst [vmem:[%s277 + $0x38] sm:$0xff] %v624
        %641 = vst [vmem:[%s277 + $0x40] sm:$0xff] %v625
        %642 = vst [vmem:[%s277 + $0x48] sm:$0xff] %v626
        %643 = vst [vmem:[%s277 + $0x50] sm:$0xff] %v627
        %644 = vst [vmem:[%s277 + $0x58] sm:$0xff] %v628
        %645 = vst [vmem:[%s277 + $0x60] sm:$0xff] %v629
        %646 = vst [vmem:[%s277 + $0x68] sm:$0xff] %v630
        %647 = vst [vmem:[%s277 + $0x70] sm:$0xff] %v631
        %648 = vst [vmem:[%s277 + $0x78] sm:$0xff] %v632
        %s649 = sand.u32 %s141, 1
        %s650 = scalar_lea.sflag [#allocation4], %s649
        %s651 = sand.u32 %s141, 1
        %s652 = smul.addr %s651, 128
        %s653 = scalar_lea.vmem [#allocation8], %s652
        // Predicated region
        $region53: #{tpu_custom_call.1} parent=39 // pred_check
          %p654 = pneg %p151
        $region54: #{tpu_custom_call.1} parent=39 // pred_check_branch
          %656 = sbr.rel (%p654) target = $region56
        $region55: #{tpu_custom_call.1} parent=39 // pred_region
          %s657 = smul.u32 16, %s23
          %659 = vsyncadd %s650, 0
          %s660 = smul.addr %s657, 8
          %s661 = scalar_lea.hbm %s5, %s660
          %s662 = sshll.u32 %s653, 4
          %s663 = int_to_ptr.vmem [resolvable:$true] %s662
          %s664 = sshll.u32 %s661, 4
          %s665 = int_to_ptr.hbm [resolvable:$true] %s664
          %670 = dma.vmem_to_hbm [thread:$0]  %s663, 2048, %s665, %s650, 128, 128, 8
        $region56: #{tpu_custom_call.1} parent=39 // pred_fallthru
          _
      $region40: #{tpu_custom_call.1} parent=5 // pred_fallthru
        _
      %p671 = scmp.le.s32.totalorder 2, %s18
      // Predicated region
      $region57: #{tpu_custom_call.1} parent=5 // pred_check
        %p672 = pneg %p671
      $region58: #{tpu_custom_call.1} parent=5 // pred_check_branch
        %674 = sbr.rel (%p672) target = $region60
      $region59: #{tpu_custom_call.1} parent=5 // pred_region
        %s675 = ssub.s32 %s18, 2
        // Predicated region
        $region61: #{tpu_custom_call.1} parent=59 // pred_check
          %p676 = pneg %p157
        $region62: #{tpu_custom_call.1} parent=59 // pred_check_branch
          %678 = sbr.rel (%p676) target = $region64
        $region63: #{tpu_custom_call.1} parent=59 // pred_region
          %s679 = sand.u32 %s142, 1
          %s680 = scalar_lea.sflag [#allocation4], %s679
          %s681 = sand.u32 %s142, 1
          %s682 = smul.addr %s681, 128
          %s683 = scalar_lea.vmem [#allocation8], %s682
          %685 = dma.done %s680, 2048
        $region64: #{tpu_custom_call.1} parent=59 // pred_fallthru
          _
      $region60: #{tpu_custom_call.1} parent=5 // pred_fallthru
        _
    $region6: #{tpu_custom_call.1} parent=1 // loop_footer
      %s22 = sadd.s32 1, %s18
    $region7: #{tpu_custom_call.1} parent=1 // loop_footer_branch
      %17 = sbr.rel target = $region3
    $region8: #{tpu_custom_call.1} parent=1 // loop_exit
      _
    %686 = vsyncpa [#allocation3], 1
    %s687 = scalar_lea.sflag [#allocation3], 1
    %688 = vsyncpa %s687, 1
    %689 = vsyncpa [#allocation6], 1
    %690 = vsyncpa [#allocation4], 1
    %s691 = scalar_lea.sflag [#allocation4], 1
    %692 = vsyncpa %s691, 1

// kernel: tpu_custom_call.1
$region0: #{tpu_custom_call.1}
  #allocation0 [shape = 'u32[]', space=smem, size = 0x4, offset = 0x4, fixed_abs, tag = 'smem constant byte address 0x4 - core index']
  #allocation1 [shape = 'u32[72,128]{1,0:T(1,128)}', space=vmem, size = 0x9000, scoped, tag = 'internal scratch']
  %s0 = inlined_call_operand.hbm [shape: f32[256,128], index: 0, kind: input, shape index: {}]
  %s1 = inlined_call_operand.hbm [shape: f32[128,128], index: 1, kind: input, shape index: {}]
  %s2 = inlined_call_operand.vmem [shape: f32[1,128], index: 2, kind: input, shape index: {}]
  %s3 = inlined_call_operand.hbm [shape: f32[2,128,128], index: 3, kind: input, shape index: {}]
  %s4 = inlined_call_operand.vmem [shape: f32[2,1,128], index: 4, kind: input, shape index: {}]
  %s5 = inlined_call_operand.hbm [shape: f32[256,128], index: 5, kind: output, shape index: {}]
  %s6 = sld [smem:[#allocation0]]
  $region65: #{tpu_custom_call.1} parent=0
    _
  %s8 = ssub.s32 1, %s6
  %s9 = scalar_select 0, %s8, %s6
  $region1: #{tpu_custom_call.1} parent=0
    #allocation2 [shape = 'u8[131072]{0}', space=vmem, size = 0x20000, scoped, tag = 'input window, operand 0']
    #allocation3 [shape = 's32[2]{0}', space=sflag, size = 0x8, scoped, tag = 'scoped memory for tpu_custom_call.1']
    #allocation4 [shape = 's32[2]{0}', space=sflag, size = 0x8, scoped, tag = 'scoped memory for tpu_custom_call.1']
    #allocation5 [shape = 'u8[65536]{0}', space=vmem, size = 0x10000, scoped, tag = 'input window, operand 1, single buffered']
    #allocation6 [shape = 's32[1]{0}', space=sflag, size = 0x4, scoped, tag = 'scoped memory for tpu_custom_call.1']
    #allocation7 [shape = 'u8[131072]{0}', space=vmem, size = 0x20000, scoped, tag = 'input window, operand 3, single buffered']
    #allocation8 [shape = 'u8[131072]{0}', space=vmem, size = 0x20000, scoped, tag = 'output window, operand 0']
    %10 = vsyncpa [#allocation3], 0
    %s11 = scalar_lea.sflag [#allocation3], 1
    %12 = vsyncpa %s11, 0
    %13 = vsyncpa [#allocation6], 0
    %14 = vsyncpa [#allocation4], 0
    %s15 = scalar_lea.sflag [#allocation4], 1
    %16 = vsyncpa %s15, 0
    loop: start=0, step=1, limit=4
    $region2: #{tpu_custom_call.1} parent=1 // loop_pre_header
      _
    $region3: #{tpu_custom_call.1} parent=1 // loop_header
      %s18 = sphi 0, %s22
      %p19 = scmp.ge.s32.totalorder %s18, 4
      %s28 = sphi 0, %s30
      %s31 = sphi 0, %s28
      %s32 = sphi 0, %s31
      %s48 = sphi 0, %s32
      %s52 = sphi 0, %s52
      %s54 = sphi 0, %s52
      %s55 = sphi 0, %s54
      %s69 = sphi 0, %s55
      %s73 = sphi 0, %s73
      %s75 = sphi 0, %s73
      %s76 = sphi 0, %s75
      %s90 = sphi 0, %s76
      %s94 = sphi 0, %s94
      %s96 = sphi 0, %s94
      %s97 = sphi 0, %s96
      %s111 = sphi 0, %s97
      %s115 = sphi 0, %s115
      %s117 = sphi 0, %s115
      %s118 = sphi 0, %s117
      %s132 = sphi 0, %s118
      %s138 = sphi 0, %s140
      %s141 = sphi 0, %s138
      %s142 = sphi 0, %s141
      %s158 = sphi 0, %s142
    $region4: #{tpu_custom_call.1} parent=1 // loop_header_branch
      %21 = sbr.rel (%p19) target = $region8
    $region5: #{tpu_custom_call.1} parent=1 // loop_body
      %s23 = ssub.s32 %s18, 1
      %s24 = ssub.s32 %s18, 2
      %s25 = sadd.s32 %s18, 1
      %s26 = ssub.s32 %s18, %s25
      %p27 = scmp.eq.s32.totalorder %s26, 0
      %s29 = sadd.s32 %s28, 1
      %s30 = scalar_select %p27, %s28, %s29
      %p33 = pneg %p27
      %p34 = scmp.eq.s32.totalorder %s18, 1
      %p35 = por %p33, %p34
      %p36 = scmp.ne.s32.totalorder %s28, %s31
      %p37 = scmp.eq.s32.totalorder %s18, 0
      %p38 = por %p36, %p37
      %p39 = scmp.ne.s32.totalorder %s28, %s31
      %p40 = scmp.eq.s32.totalorder %s23, 1
      %p41 = por %p39, %p40
      %p42 = scmp.ne.s32.totalorder %s31, %s32
      %p43 = scmp.eq.s32.totalorder %s23, 0
      %p44 = por %p42, %p43
      %p45 = scmp.ne.s32.totalorder %s31, %s32
      %p46 = scmp.eq.s32.totalorder %s24, 1
      %p47 = por %p45, %p46
      %p49 = scmp.ne.s32.totalorder %s32, %s48
      %p50 = scmp.eq.s32.totalorder %s24, 0
      %p51 = por %p49, %p50
      %s53 = sadd.s32 %s52, 1
      %p56 = scmp.eq.s32.totalorder %s18, 1
      %p57 = scmp.ne.s32.totalorder %s52, %s54
      %p58 = scmp.eq.s32.totalorder %s18, 0
      %p59 = por %p57, %p58
      %p60 = scmp.ne.s32.totalorder %s52, %s54
      %p61 = scmp.eq.s32.totalorder %s23, 1
      %p62 = por %p60, %p61
      %p63 = scmp.ne.s32.totalorder %s54, %s55
      %p64 = scmp.eq.s32.totalorder %s23, 0
      %p65 = por %p63, %p64
      %p66 = scmp.ne.s32.totalorder %s54, %s55
      %p67 = scmp.eq.s32.totalorder %s24, 1
      %p68 = por %p66, %p67
      %p70 = scmp.ne.s32.totalorder %s55, %s69
      %p71 = scmp.eq.s32.totalorder %s24, 0
      %p72 = por %p70, %p71
      %s74 = sadd.s32 %s73, 1
      %p77 = scmp.eq.s32.totalorder %s18, 1
      %p78 = scmp.ne.s32.totalorder %s73, %s75
      %p79 = scmp.eq.s32.totalorder %s18, 0
      %p80 = por %p78, %p79
      %p81 = scmp.ne.s32.totalorder %s73, %s75
      %p82 = scmp.eq.s32.totalorder %s23, 1
      %p83 = por %p81, %p82
      %p84 = scmp.ne.s32.totalorder %s75, %s76
      %p85 = scmp.eq.s32.totalorder %s23, 0
      %p86 = por %p84, %p85
      %p87 = scmp.ne.s32.totalorder %s75, %s76
      %p88 = scmp.eq.s32.totalorder %s24, 1
      %p89 = por %p87, %p88
      %p91 = scmp.ne.s32.totalorder %s76, %s90
      %p92 = scmp.eq.s32.totalorder %s24, 0
      %p93 = por %p91, %p92
      %s95 = sadd.s32 %s94, 1
      %p98 = scmp.eq.s32.totalorder %s18, 1
      %p99 = scmp.ne.s32.totalorder %s94, %s96
      %p100 = scmp.eq.s32.totalorder %s18, 0
      %p101 = por %p99, %p100
      %p102 = scmp.ne.s32.totalorder %s94, %s96
      %p103 = scmp.eq.s32.totalorder %s23, 1
      %p104 = por %p102, %p103
      %p105 = scmp.ne.s32.totalorder %s96, %s97
      %p106 = scmp.eq.s32.totalorder %s23, 0
      %p107 = por %p105, %p106
      %p108 = scmp.ne.s32.totalorder %s96, %s97
      %p109 = scmp.eq.s32.totalorder %s24, 1
      %p110 = por %p108, %p109
      %p112 = scmp.ne.s32.totalorder %s97, %s111
      %p113 = scmp.eq.s32.totalorder %s24, 0
      %p114 = por %p112, %p113
      %s116 = sadd.s32 %s115, 1
      %p119 = scmp.eq.s32.totalorder %s18, 1
      %p120 = scmp.ne.s32.totalorder %s115, %s117
      %p121 = scmp.eq.s32.totalorder %s18, 0
      %p122 = por %p120, %p121
      %p123 = scmp.ne.s32.totalorder %s115, %s117
      %p124 = scmp.eq.s32.totalorder %s23, 1
      %p125 = por %p123, %p124
      %p126 = scmp.ne.s32.totalorder %s117, %s118
      %p127 = scmp.eq.s32.totalorder %s23, 0
      %p128 = por %p126, %p127
      %p129 = scmp.ne.s32.totalorder %s117, %s118
      %p130 = scmp.eq.s32.totalorder %s24, 1
      %p131 = por %p129, %p130
      %p133 = scmp.ne.s32.totalorder %s118, %s132
      %p134 = scmp.eq.s32.totalorder %s24, 0
      %p135 = por %p133, %p134
      %s136 = ssub.s32 %s18, %s25
      %p137 = scmp.eq.s32.totalorder %s136, 0
      %s139 = sadd.s32 %s138, 1
      %s140 = scalar_select %p137, %s138, %s139
      %p143 = pneg %p137
      %p144 = scmp.eq.s32.totalorder %s18, 1
      %p145 = por %p143, %p144
      %p146 = scmp.ne.s32.totalorder %s138, %s141
      %p147 = scmp.eq.s32.totalorder %s18, 0
      %p148 = por %p146, %p147
      %p149 = scmp.ne.s32.totalorder %s138, %s141
      %p150 = scmp.eq.s32.totalorder %s23, 1
      %p151 = por %p149, %p150
      %p152 = scmp.ne.s32.totalorder %s141, %s142
      %p153 = scmp.eq.s32.totalorder %s23, 0
      %p154 = por %p152, %p153
      %p155 = scmp.ne.s32.totalorder %s141, %s142
      %p156 = scmp.eq.s32.totalorder %s24, 1
      %p157 = por %p155, %p156
      %p159 = scmp.ne.s32.totalorder %s142, %s158
      %p160 = scmp.eq.s32.totalorder %s24, 0
      %p161 = por %p159, %p160
      %p162 = scmp.le.s32.totalorder 1, %s18
      %p163 = scmp.lt.s32.totalorder %s18, 3
      %p164 = pnand %p162, %p163
      %p165 = pneg %p164
      // Predicated region
      $region9: #{tpu_custom_call.1} parent=5 // pred_check
        _
      $region10: #{tpu_custom_call.1} parent=5 // pred_check_branch
        %167 = sbr.rel (%p164) target = $region12
      $region11: #{tpu_custom_call.1} parent=5 // pred_region
        %s168 = ssub.s32 %s18, 1
        // Predicated region
        $region13: #{tpu_custom_call.1} parent=11 // pred_check
          %p169 = pneg %p65
        $region14: #{tpu_custom_call.1} parent=11 // pred_check_branch
          %171 = sbr.rel (%p169) target = $region16
        $region15: #{tpu_custom_call.1} parent=11 // pred_region
          %173 = vsyncadd [#allocation6], 0
          %s174 = sshll.u32 %s1, 4
          %s175 = int_to_ptr.hbm [resolvable:$true] %s174
          %s176 = sshll.u32 [#allocation5], 4
          %s177 = int_to_ptr.vmem [resolvable:$true] %s176
          %182 = dma.hbm_to_vmem [thread:$0]  %s175, 2048, %s177, [#allocation6], 128, 128, 8
        $region16: #{tpu_custom_call.1} parent=11 // pred_fallthru
          _
        // Predicated region
        $region17: #{tpu_custom_call.1} parent=11 // pred_check
          %p183 = pneg %p86
        $region18: #{tpu_custom_call.1} parent=11 // pred_check_branch
          %185 = sbr.rel (%p183) target = $region20
        $region19: #{tpu_custom_call.1} parent=11 // pred_region
          _
        $region20: #{tpu_custom_call.1} parent=11 // pred_fallthru
          _
        // Predicated region
        $region21: #{tpu_custom_call.1} parent=11 // pred_check
          %p186 = pneg %p107
        $region22: #{tpu_custom_call.1} parent=11 // pred_check_branch
          %188 = sbr.rel (%p186) target = $region24
        $region23: #{tpu_custom_call.1} parent=11 // pred_region
          %190 = vsyncadd [#allocation6], 0
          %s191 = sshll.u32 %s3, 4
          %s192 = int_to_ptr.hbm [resolvable:$true] %s191
          %s193 = sshll.u32 [#allocation7], 4
          %s194 = int_to_ptr.vmem [resolvable:$true] %s193
          %199 = dma.hbm_to_vmem [thread:$0]  %s192, 4096, %s194, [#allocation6], 128, 128, 8
        $region24: #{tpu_custom_call.1} parent=11 // pred_fallthru
          _
        // Predicated region
        $region25: #{tpu_custom_call.1} parent=11 // pred_check
          %p200 = pneg %p128
        $region26: #{tpu_custom_call.1} parent=11 // pred_check_branch
          %202 = sbr.rel (%p200) target = $region28
        $region27: #{tpu_custom_call.1} parent=11 // pred_region
          _
        $region28: #{tpu_custom_call.1} parent=11 // pred_fallthru
          _
      $region12: #{tpu_custom_call.1} parent=5 // pred_fallthru
        _
      %p203 = scmp.lt.s32.totalorder %s18, 2
      // Predicated region
      $region29: #{tpu_custom_call.1} parent=5 // pred_check
        %p204 = pneg %p203
      $region30: #{tpu_custom_call.1} parent=5 // pred_check_branch
        %206 = sbr.rel (%p204) target = $region32
      $region31: #{tpu_custom_call.1} parent=5 // pred_region
        // Predicated region
        $region33: #{tpu_custom_call.1} parent=31 // pred_check
          %p207 = pneg %p38
        $region34: #{tpu_custom_call.1} parent=31 // pred_check_branch
          %209 = sbr.rel (%p207) target = $region36
        $region35: #{tpu_custom_call.1} parent=31 // pred_region
          %s210 = sand.u32 %s28, 1
          %s211 = scalar_lea.sflag [#allocation3], %s210
          %s212 = sand.u32 %s28, 1
          %s213 = smul.addr %s212, 128
          %s214 = scalar_lea.vmem [#allocation2], %s213
          %s215 = smul.u32 16, %s18
          %217 = vsyncadd %s211, 0
          %s218 = smul.addr %s215, 8
          %s219 = scalar_lea.hbm %s0, %s218
          %s220 = sshll.u32 %s219, 4
          %s221 = int_to_ptr.hbm [resolvable:$true] %s220
          %s222 = sshll.u32 %s214, 4
          %s223 = int_to_ptr.vmem [resolvable:$true] %s222
          %228 = dma.hbm_to_vmem [thread:$0]  %s221, 2048, %s223, %s211, 128, 128, 8
        $region36: #{tpu_custom_call.1} parent=31 // pred_fallthru
          _
      $region32: #{tpu_custom_call.1} parent=5 // pred_fallthru
        _
      %p229 = scmp.le.s32.totalorder 1, %s18
      %p230 = scmp.lt.s32.totalorder %s18, 3
      %p231 = pnand %p229, %p230
      %p232 = pneg %p231
      // Predicated region
      $region37: #{tpu_custom_call.1} parent=5 // pred_check
        _
      $region38: #{tpu_custom_call.1} parent=5 // pred_check_branch
        %234 = sbr.rel (%p231) target = $region40
      $region39: #{tpu_custom_call.1} parent=5 // pred_region
        %s235 = ssub.s32 %s18, 1
        %s236 = sand.u32 %s31, 1
        %s237 = scalar_lea.sflag [#allocation3], %s236
        %s238 = sand.u32 %s31, 1
        %s239 = smul.addr %s238, 128
        %s240 = scalar_lea.vmem [#allocation2], %s239
        // Predicated region
        $region41: #{tpu_custom_call.1} parent=39 // pred_check
          %p241 = pneg %p44
        $region42: #{tpu_custom_call.1} parent=39 // pred_check_branch
          %243 = sbr.rel (%p241) target = $region44
        $region43: #{tpu_custom_call.1} parent=39 // pred_region
          %245 = dma.done %s237, 2048
        $region44: #{tpu_custom_call.1} parent=39 // pred_fallthru
          _
        // Predicated region
        $region45: #{tpu_custom_call.1} parent=39 // pred_check
          %p246 = pneg %p65
        $region46: #{tpu_custom_call.1} parent=39 // pred_check_branch
          %248 = sbr.rel (%p246) target = $region48
        $region47: #{tpu_custom_call.1} parent=39 // pred_region
          %250 = dma.done [#allocation6], 2048
        $region48: #{tpu_custom_call.1} parent=39 // pred_fallthru
          _
        // Predicated region
        $region49: #{tpu_custom_call.1} parent=39 // pred_check
          %p251 = pneg %p107
        $region50: #{tpu_custom_call.1} parent=39 // pred_check_branch
          %253 = sbr.rel (%p251) target = $region52
        $region51: #{tpu_custom_call.1} parent=39 // pred_region
          %255 = dma.done [#allocation6], 4096
        $region52: #{tpu_custom_call.1} parent=39 // pred_fallthru
          _
        %s256 = sand.u32 %s31, 1
        %s257 = scalar_lea.sflag [#allocation3], %s256
        %s258 = sand.u32 %s31, 1
        %s259 = smul.addr %s258, 128
        %s260 = scalar_lea.vmem [#allocation2], %s259
        %p261 = pneg %p44
        %p262 = pneg %p41
        %p263 = pneg %p65
        %p264 = pneg %p62
        %p265 = pneg %p86
        %p266 = pneg %p83
        %p267 = pneg %p107
        %p268 = pneg %p104
        %p269 = pneg %p128
        %p270 = pneg %p125
        %p271 = pneg %p154
        %p272 = pneg %p151
        %s273 = sand.u32 %s141, 1
        %s274 = scalar_lea.sflag [#allocation4], %s273
        %s275 = sand.u32 %s141, 1
        %s276 = smul.addr %s275, 128
        %s277 = scalar_lea.vmem [#allocation8], %s276
        %s278 = smul.u32 16, %s23
        %s279 = smul.u32 16, %s23
        %v280 = vld [vmem:[%s240] sm:$0xff]
        %v281 = vld [vmem:[%s240 + $0x8] sm:$0xff]
        %v282 = vld [vmem:[%s240 + $0x10] sm:$0xff]
        %v283 = vld [vmem:[%s240 + $0x18] sm:$0xff]
        %v284 = vld [vmem:[%s240 + $0x20] sm:$0xff]
        %v285 = vld [vmem:[%s240 + $0x28] sm:$0xff]
        %v286 = vld [vmem:[%s240 + $0x30] sm:$0xff]
        %v287 = vld [vmem:[%s240 + $0x38] sm:$0xff]
        %v288 = vld [vmem:[%s240 + $0x40] sm:$0xff]
        %v289 = vld [vmem:[%s240 + $0x48] sm:$0xff]
        %v290 = vld [vmem:[%s240 + $0x50] sm:$0xff]
        %v291 = vld [vmem:[%s240 + $0x58] sm:$0xff]
        %v292 = vld [vmem:[%s240 + $0x60] sm:$0xff]
        %v293 = vld [vmem:[%s240 + $0x68] sm:$0xff]
        %v294 = vld [vmem:[%s240 + $0x70] sm:$0xff]
        %v295 = vld [vmem:[%s240 + $0x78] sm:$0xff]
        %v296 = vld [vmem:[#allocation7] sm:$0xff]
        %v297 = vld [vmem:[#allocation7 + $0x8] sm:$0xff]
        %v298 = vld [vmem:[#allocation7 + $0x10] sm:$0xff]
        %v299 = vld [vmem:[#allocation7 + $0x18] sm:$0xff]
        %v300 = vld [vmem:[#allocation7 + $0x20] sm:$0xff]
        %v301 = vld [vmem:[#allocation7 + $0x28] sm:$0xff]
        %v302 = vld [vmem:[#allocation7 + $0x30] sm:$0xff]
        %v303 = vld [vmem:[#allocation7 + $0x38] sm:$0xff]
        %v304 = vld [vmem:[#allocation7 + $0x40] sm:$0xff]
        %v305 = vld [vmem:[#allocation7 + $0x48] sm:$0xff]
        %v306 = vld [vmem:[#allocation7 + $0x50] sm:$0xff]
        %v307 = vld [vmem:[#allocation7 + $0x58] sm:$0xff]
        %v308 = vld [vmem:[#allocation7 + $0x60] sm:$0xff]
        %v309 = vld [vmem:[#allocation7 + $0x68] sm:$0xff]
        %v310 = vld [vmem:[#allocation7 + $0x70] sm:$0xff]
        %v311 = vld [vmem:[#allocation7 + $0x78] sm:$0xff]
        %v312 = vld [vmem:[%s4] sm:$0x1]
        %v314 = vperm.slane %v312, 0
        %316 = vmatpush.msra.mxu0 %v311
        %317 = vmatpush.msra.mxu0 %v310
        %318 = vmatpush.msra.mxu0 %v309
        %319 = vmatpush.msra.mxu0 %v308
        %320 = vmatpush.msra.mxu0 %v307
        %321 = vmatpush.msra.mxu0 %v306
        %322 = vmatpush.msra.mxu0 %v305
        %323 = vmatpush.msra.mxu0 %v304
        %324 = vmatpush.msra.mxu0 %v303
        %325 = vmatpush.msra.mxu0 %v302
        %326 = vmatpush.msra.mxu0 %v301
        %327 = vmatpush.msra.mxu0 %v300
        %328 = vmatpush.msra.mxu0 %v299
        %329 = vmatpush.msra.mxu0 %v298
        %330 = vmatpush.msra.mxu0 %v297
        %331 = vmatpush.msra.mxu0 %v296
        %332 = vmatmul.f32.gmra.mxu0 %v280
        %v333 = vpop.f32.mrf.mxu0
        %v334 = vadd.f32 %v314, %v333
        %335 = vmatmul.f32.gmra.mxu0 %v281
        %v336 = vpop.f32.mrf.mxu0
        %v337 = vadd.f32 %v314, %v336
        %338 = vmatmul.f32.gmra.mxu0 %v282
        %v339 = vpop.f32.mrf.mxu0
        %v340 = vadd.f32 %v314, %v339
        %341 = vmatmul.f32.gmra.mxu0 %v283
        %v342 = vpop.f32.mrf.mxu0
        %v343 = vadd.f32 %v314, %v342
        %344 = vmatmul.f32.gmra.mxu0 %v284
        %v345 = vpop.f32.mrf.mxu0
        %v346 = vadd.f32 %v314, %v345
        %347 = vmatmul.f32.gmra.mxu0 %v285
        %v348 = vpop.f32.mrf.mxu0
        %v349 = vadd.f32 %v314, %v348
        %350 = vmatmul.f32.gmra.mxu0 %v286
        %v351 = vpop.f32.mrf.mxu0
        %v352 = vadd.f32 %v314, %v351
        %353 = vmatmul.f32.gmra.mxu0 %v287
        %v354 = vpop.f32.mrf.mxu0
        %v355 = vadd.f32 %v314, %v354
        %356 = vmatmul.f32.gmra.mxu0 %v288
        %v357 = vpop.f32.mrf.mxu0
        %v358 = vadd.f32 %v314, %v357
        %359 = vmatmul.f32.gmra.mxu0 %v289
        %v360 = vpop.f32.mrf.mxu0
        %v361 = vadd.f32 %v314, %v360
        %362 = vmatmul.f32.gmra.mxu0 %v290
        %v363 = vpop.f32.mrf.mxu0
        %v364 = vadd.f32 %v314, %v363
        %365 = vmatmul.f32.gmra.mxu0 %v291
        %v366 = vpop.f32.mrf.mxu0
        %v367 = vadd.f32 %v314, %v366
        %368 = vmatmul.f32.gmra.mxu0 %v292
        %v369 = vpop.f32.mrf.mxu0
        %v370 = vadd.f32 %v314, %v369
        %371 = vmatmul.f32.gmra.mxu0 %v293
        %v372 = vpop.f32.mrf.mxu0
        %v373 = vadd.f32 %v314, %v372
        %374 = vmatmul.f32.gmra.mxu0 %v294
        %v375 = vpop.f32.mrf.mxu0
        %v376 = vadd.f32 %v314, %v375
        %377 = vmatmul.f32.gmra.mxu0 %v295
        %v378 = vpop.f32.mrf.mxu0
        %v379 = vadd.f32 %v314, %v378
        %380 = vdwg.mxu0
        %v381 = vmul.f32 %v334, 0.01
        %v382 = vmul.f32 %v337, 0.01
        %v383 = vmul.f32 %v340, 0.01
        %v384 = vmul.f32 %v343, 0.01
        %v385 = vmul.f32 %v346, 0.01
        %v386 = vmul.f32 %v349, 0.01
        %v387 = vmul.f32 %v352, 0.01
        %v388 = vmul.f32 %v355, 0.01
        %v389 = vmul.f32 %v358, 0.01
        %v390 = vmul.f32 %v361, 0.01
        %v391 = vmul.f32 %v364, 0.01
        %v392 = vmul.f32 %v367, 0.01
        %v393 = vmul.f32 %v370, 0.01
        %v394 = vmul.f32 %v373, 0.01
        %v395 = vmul.f32 %v376, 0.01
        %v396 = vmul.f32 %v379, 0.01
        %v397 = vmax.f32 %v334, %v381
        %v398 = vmax.f32 %v337, %v382
        %v399 = vmax.f32 %v340, %v383
        %v400 = vmax.f32 %v343, %v384
        %v401 = vmax.f32 %v346, %v385
        %v402 = vmax.f32 %v349, %v386
        %v403 = vmax.f32 %v352, %v387
        %v404 = vmax.f32 %v355, %v388
        %v405 = vmax.f32 %v358, %v389
        %v406 = vmax.f32 %v361, %v390
        %v407 = vmax.f32 %v364, %v391
        %v408 = vmax.f32 %v367, %v392
        %v409 = vmax.f32 %v370, %v393
        %v410 = vmax.f32 %v373, %v394
        %v411 = vmax.f32 %v376, %v395
        %v412 = vmax.f32 %v379, %v396
        %s413 = scalar_lea.vmem [#allocation7], 128
        %v414 = vld [vmem:[%s413] sm:$0xff]
        %v415 = vld [vmem:[%s413 + $0x8] sm:$0xff]
        %v416 = vld [vmem:[%s413 + $0x10] sm:$0xff]
        %v417 = vld [vmem:[%s413 + $0x18] sm:$0xff]
        %v418 = vld [vmem:[%s413 + $0x20] sm:$0xff]
        %v419 = vld [vmem:[%s413 + $0x28] sm:$0xff]
        %v420 = vld [vmem:[%s413 + $0x30] sm:$0xff]
        %v421 = vld [vmem:[%s413 + $0x38] sm:$0xff]
        %v422 = vld [vmem:[%s413 + $0x40] sm:$0xff]
        %v423 = vld [vmem:[%s413 + $0x48] sm:$0xff]
        %v424 = vld [vmem:[%s413 + $0x50] sm:$0xff]
        %v425 = vld [vmem:[%s413 + $0x58] sm:$0xff]
        %v426 = vld [vmem:[%s413 + $0x60] sm:$0xff]
        %v427 = vld [vmem:[%s413 + $0x68] sm:$0xff]
        %v428 = vld [vmem:[%s413 + $0x70] sm:$0xff]
        %v429 = vld [vmem:[%s413 + $0x78] sm:$0xff]
        %s430 = scalar_lea.vmem %s4, 1
        %v431 = vld [vmem:[%s430] sm:$0x1]
        %v433 = vperm.slane %v431, 0
        %435 = vmatpush.msra.mxu0 %v429
        %436 = vmatpush.msra.mxu0 %v428
        %437 = vmatpush.msra.mxu0 %v427
        %438 = vmatpush.msra.mxu0 %v426
        %439 = vmatpush.msra.mxu0 %v425
        %440 = vmatpush.msra.mxu0 %v424
        %441 = vmatpush.msra.mxu0 %v423
        %442 = vmatpush.msra.mxu0 %v422
        %443 = vmatpush.msra.mxu0 %v421
        %444 = vmatpush.msra.mxu0 %v420
        %445 = vmatpush.msra.mxu0 %v419
        %446 = vmatpush.msra.mxu0 %v418
        %447 = vmatpush.msra.mxu0 %v417
        %448 = vmatpush.msra.mxu0 %v416
        %449 = vmatpush.msra.mxu0 %v415
        %450 = vmatpush.msra.mxu0 %v414
        %451 = vmatmul.f32.gmra.mxu0 %v397
        %v452 = vpop.f32.mrf.mxu0
        %v453 = vadd.f32 %v433, %v452
        %454 = vmatmul.f32.gmra.mxu0 %v398
        %v455 = vpop.f32.mrf.mxu0
        %v456 = vadd.f32 %v433, %v455
        %457 = vmatmul.f32.gmra.mxu0 %v399
        %v458 = vpop.f32.mrf.mxu0
        %v459 = vadd.f32 %v433, %v458
        %460 = vmatmul.f32.gmra.mxu0 %v400
        %v461 = vpop.f32.mrf.mxu0
        %v462 = vadd.f32 %v433, %v461
        %463 = vmatmul.f32.gmra.mxu0 %v401
        %v464 = vpop.f32.mrf.mxu0
        %v465 = vadd.f32 %v433, %v464
        %466 = vmatmul.f32.gmra.mxu0 %v402
        %v467 = vpop.f32.mrf.mxu0
        %v468 = vadd.f32 %v433, %v467
        %469 = vmatmul.f32.gmra.mxu0 %v403
        %v470 = vpop.f32.mrf.mxu0
        %v471 = vadd.f32 %v433, %v470
        %472 = vmatmul.f32.gmra.mxu0 %v404
        %v473 = vpop.f32.mrf.mxu0
        %v474 = vadd.f32 %v433, %v473
        %475 = vmatmul.f32.gmra.mxu0 %v405
        %v476 = vpop.f32.mrf.mxu0
        %v477 = vadd.f32 %v433, %v476
        %478 = vmatmul.f32.gmra.mxu0 %v406
        %v479 = vpop.f32.mrf.mxu0
        %v480 = vadd.f32 %v433, %v479
        %481 = vmatmul.f32.gmra.mxu0 %v407
        %v482 = vpop.f32.mrf.mxu0
        %v483 = vadd.f32 %v433, %v482
        %484 = vmatmul.f32.gmra.mxu0 %v408
        %v485 = vpop.f32.mrf.mxu0
        %v486 = vadd.f32 %v433, %v485
        %487 = vmatmul.f32.gmra.mxu0 %v409
        %v488 = vpop.f32.mrf.mxu0
        %v489 = vadd.f32 %v433, %v488
        %490 = vmatmul.f32.gmra.mxu0 %v410
        %v491 = vpop.f32.mrf.mxu0
        %v492 = vadd.f32 %v433, %v491
        %493 = vmatmul.f32.gmra.mxu0 %v411
        %v494 = vpop.f32.mrf.mxu0
        %v495 = vadd.f32 %v433, %v494
        %496 = vmatmul.f32.gmra.mxu0 %v412
        %v497 = vpop.f32.mrf.mxu0
        %v498 = vadd.f32 %v433, %v497
        %499 = vdwg.mxu0
        %v500 = vmul.f32 %v453, 0.01
        %v501 = vmul.f32 %v456, 0.01
        %v502 = vmul.f32 %v459, 0.01
        %v503 = vmul.f32 %v462, 0.01
        %v504 = vmul.f32 %v465, 0.01
        %v505 = vmul.f32 %v468, 0.01
        %v506 = vmul.f32 %v471, 0.01
        %v507 = vmul.f32 %v474, 0.01
        %v508 = vmul.f32 %v477, 0.01
        %v509 = vmul.f32 %v480, 0.01
        %v510 = vmul.f32 %v483, 0.01
        %v511 = vmul.f32 %v486, 0.01
        %v512 = vmul.f32 %v489, 0.01
        %v513 = vmul.f32 %v492, 0.01
        %v514 = vmul.f32 %v495, 0.01
        %v515 = vmul.f32 %v498, 0.01
        %v516 = vmax.f32 %v453, %v500
        %v517 = vmax.f32 %v456, %v501
        %v518 = vmax.f32 %v459, %v502
        %v519 = vmax.f32 %v462, %v503
        %v520 = vmax.f32 %v465, %v504
        %v521 = vmax.f32 %v468, %v505
        %v522 = vmax.f32 %v471, %v506
        %v523 = vmax.f32 %v474, %v507
        %v524 = vmax.f32 %v477, %v508
        %v525 = vmax.f32 %v480, %v509
        %v526 = vmax.f32 %v483, %v510
        %v527 = vmax.f32 %v486, %v511
        %v528 = vmax.f32 %v489, %v512
        %v529 = vmax.f32 %v492, %v513
        %v530 = vmax.f32 %v495, %v514
        %v531 = vmax.f32 %v498, %v515
        %v532 = vld [vmem:[#allocation5] sm:$0xff]
        %v533 = vld [vmem:[#allocation5 + $0x8] sm:$0xff]
        %v534 = vld [vmem:[#allocation5 + $0x10] sm:$0xff]
        %v535 = vld [vmem:[#allocation5 + $0x18] sm:$0xff]
        %v536 = vld [vmem:[#allocation5 + $0x20] sm:$0xff]
        %v537 = vld [vmem:[#allocation5 + $0x28] sm:$0xff]
        %v538 = vld [vmem:[#allocation5 + $0x30] sm:$0xff]
        %v539 = vld [vmem:[#allocation5 + $0x38] sm:$0xff]
        %v540 = vld [vmem:[#allocation5 + $0x40] sm:$0xff]
        %v541 = vld [vmem:[#allocation5 + $0x48] sm:$0xff]
        %v542 = vld [vmem:[#allocation5 + $0x50] sm:$0xff]
        %v543 = vld [vmem:[#allocation5 + $0x58] sm:$0xff]
        %v544 = vld [vmem:[#allocation5 + $0x60] sm:$0xff]
        %v545 = vld [vmem:[#allocation5 + $0x68] sm:$0xff]
        %v546 = vld [vmem:[#allocation5 + $0x70] sm:$0xff]
        %v547 = vld [vmem:[#allocation5 + $0x78] sm:$0xff]
        %v548 = vld [vmem:[%s2] sm:$0x1]
        %v550 = vperm.slane %v548, 0
        %552 = vmatpush.msra.mxu0 %v547
        %553 = vmatpush.msra.mxu0 %v546
        %554 = vmatpush.msra.mxu0 %v545
        %555 = vmatpush.msra.mxu0 %v544
        %556 = vmatpush.msra.mxu0 %v543
        %557 = vmatpush.msra.mxu0 %v542
        %558 = vmatpush.msra.mxu0 %v541
        %559 = vmatpush.msra.mxu0 %v540
        %560 = vmatpush.msra.mxu0 %v539
        %561 = vmatpush.msra.mxu0 %v538
        %562 = vmatpush.msra.mxu0 %v537
        %563 = vmatpush.msra.mxu0 %v536
        %564 = vmatpush.msra.mxu0 %v535
        %565 = vmatpush.msra.mxu0 %v534
        %566 = vmatpush.msra.mxu0 %v533
        %567 = vmatpush.msra.mxu0 %v532
        %568 = vmatmul.f32.gmra.mxu0 %v280
        %v569 = vpop.f32.mrf.mxu0
        %v570 = vadd.f32 %v550, %v569
        %571 = vmatmul.f32.gmra.mxu0 %v281
        %v572 = vpop.f32.mrf.mxu0
        %v573 = vadd.f32 %v550, %v572
        %574 = vmatmul.f32.gmra.mxu0 %v282
        %v575 = vpop.f32.mrf.mxu0
        %v576 = vadd.f32 %v550, %v575
        %577 = vmatmul.f32.gmra.mxu0 %v283
        %v578 = vpop.f32.mrf.mxu0
        %v579 = vadd.f32 %v550, %v578
        %580 = vmatmul.f32.gmra.mxu0 %v284
        %v581 = vpop.f32.mrf.mxu0
        %v582 = vadd.f32 %v550, %v581
        %583 = vmatmul.f32.gmra.mxu0 %v285
        %v584 = vpop.f32.mrf.mxu0
        %v585 = vadd.f32 %v550, %v584
        %586 = vmatmul.f32.gmra.mxu0 %v286
        %v587 = vpop.f32.mrf.mxu0
        %v588 = vadd.f32 %v550, %v587
        %589 = vmatmul.f32.gmra.mxu0 %v287
        %v590 = vpop.f32.mrf.mxu0
        %v591 = vadd.f32 %v550, %v590
        %592 = vmatmul.f32.gmra.mxu0 %v288
        %v593 = vpop.f32.mrf.mxu0
        %v594 = vadd.f32 %v550, %v593
        %595 = vmatmul.f32.gmra.mxu0 %v289
        %v596 = vpop.f32.mrf.mxu0
        %v597 = vadd.f32 %v550, %v596
        %598 = vmatmul.f32.gmra.mxu0 %v290
        %v599 = vpop.f32.mrf.mxu0
        %v600 = vadd.f32 %v550, %v599
        %601 = vmatmul.f32.gmra.mxu0 %v291
        %v602 = vpop.f32.mrf.mxu0
        %v603 = vadd.f32 %v550, %v602
        %604 = vmatmul.f32.gmra.mxu0 %v292
        %v605 = vpop.f32.mrf.mxu0
        %v606 = vadd.f32 %v550, %v605
        %607 = vmatmul.f32.gmra.mxu0 %v293
        %v608 = vpop.f32.mrf.mxu0
        %v609 = vadd.f32 %v550, %v608
        %610 = vmatmul.f32.gmra.mxu0 %v294
        %v611 = vpop.f32.mrf.mxu0
        %v612 = vadd.f32 %v550, %v611
        %613 = vmatmul.f32.gmra.mxu0 %v295
        %v614 = vpop.f32.mrf.mxu0
        %v615 = vadd.f32 %v550, %v614
        %616 = vdwg.mxu0
        %v617 = vadd.f32 %v570, %v516
        %v618 = vadd.f32 %v573, %v517
        %v619 = vadd.f32 %v576, %v518
        %v620 = vadd.f32 %v579, %v519
        %v621 = vadd.f32 %v582, %v520
        %v622 = vadd.f32 %v585, %v521
        %v623 = vadd.f32 %v588, %v522
        %v624 = vadd.f32 %v591, %v523
        %v625 = vadd.f32 %v594, %v524
        %v626 = vadd.f32 %v597, %v525
        %v627 = vadd.f32 %v600, %v526
        %v628 = vadd.f32 %v603, %v527
        %v629 = vadd.f32 %v606, %v528
        %v630 = vadd.f32 %v609, %v529
        %v631 = vadd.f32 %v612, %v530
        %v632 = vadd.f32 %v615, %v531
        %633 = vst [vmem:[%s277] sm:$0xff] %v617
        %634 = vst [vmem:[%s277 + $0x8] sm:$0xff] %v618
        %635 = vst [vmem:[%s277 + $0x10] sm:$0xff] %v619
        %636 = vst [vmem:[%s277 + $0x18] sm:$0xff] %v620
        %637 = vst [vmem:[%s277 + $0x20] sm:$0xff] %v621
        %638 = vst [vmem:[%s277 + $0x28] sm:$0xff] %v622
        %639 = vst [vmem:[%s277 + $0x30] sm:$0xff] %v623
        %640 = vst [vmem:[%s277 + $0x38] sm:$0xff] %v624
        %641 = vst [vmem:[%s277 + $0x40] sm:$0xff] %v625
        %642 = vst [vmem:[%s277 + $0x48] sm:$0xff] %v626
        %643 = vst [vmem:[%s277 + $0x50] sm:$0xff] %v627
        %644 = vst [vmem:[%s277 + $0x58] sm:$0xff] %v628
        %645 = vst [vmem:[%s277 + $0x60] sm:$0xff] %v629
        %646 = vst [vmem:[%s277 + $0x68] sm:$0xff] %v630
        %647 = vst [vmem:[%s277 + $0x70] sm:$0xff] %v631
        %648 = vst [vmem:[%s277 + $0x78] sm:$0xff] %v632
        %s649 = sand.u32 %s141, 1
        %s650 = scalar_lea.sflag [#allocation4], %s649
        %s651 = sand.u32 %s141, 1
        %s652 = smul.addr %s651, 128
        %s653 = scalar_lea.vmem [#allocation8], %s652
        // Predicated region
        $region53: #{tpu_custom_call.1} parent=39 // pred_check
          %p654 = pneg %p151
        $region54: #{tpu_custom_call.1} parent=39 // pred_check_branch
          %656 = sbr.rel (%p654) target = $region56
        $region55: #{tpu_custom_call.1} parent=39 // pred_region
          %s657 = smul.u32 16, %s23
          %659 = vsyncadd %s650, 0
          %s660 = smul.addr %s657, 8
          %s661 = scalar_lea.hbm %s5, %s660
          %s662 = sshll.u32 %s653, 4
          %s663 = int_to_ptr.vmem [resolvable:$true] %s662
          %s664 = sshll.u32 %s661, 4
          %s665 = int_to_ptr.hbm [resolvable:$true] %s664
          %670 = dma.vmem_to_hbm [thread:$0]  %s663, 2048, %s665, %s650, 128, 128, 8
        $region56: #{tpu_custom_call.1} parent=39 // pred_fallthru
          _
      $region40: #{tpu_custom_call.1} parent=5 // pred_fallthru
        _
      %p671 = scmp.le.s32.totalorder 2, %s18
      // Predicated region
      $region57: #{tpu_custom_call.1} parent=5 // pred_check
        %p672 = pneg %p671
      $region58: #{tpu_custom_call.1} parent=5 // pred_check_branch
        %674 = sbr.rel (%p672) target = $region60
      $region59: #{tpu_custom_call.1} parent=5 // pred_region
        %s675 = ssub.s32 %s18, 2
        // Predicated region
        $region61: #{tpu_custom_call.1} parent=59 // pred_check
          %p676 = pneg %p157
        $region62: #{tpu_custom_call.1} parent=59 // pred_check_branch
          %678 = sbr.rel (%p676) target = $region64
        $region63: #{tpu_custom_call.1} parent=59 // pred_region
          %s679 = sand.u32 %s142, 1
          %s680 = scalar_lea.sflag [#allocation4], %s679
          %s681 = sand.u32 %s142, 1
          %s682 = smul.addr %s681, 128
          %s683 = scalar_lea.vmem [#allocation8], %s682
          %685 = dma.done %s680, 2048
        $region64: #{tpu_custom_call.1} parent=59 // pred_fallthru
          _
      $region60: #{tpu_custom_call.1} parent=5 // pred_fallthru
        _
    $region6: #{tpu_custom_call.1} parent=1 // loop_footer
      %s22 = sadd.s32 1, %s18
    $region7: #{tpu_custom_call.1} parent=1 // loop_footer_branch
      %17 = sbr.rel target = $region3
    $region8: #{tpu_custom_call.1} parent=1 // loop_exit
      _
    %686 = vsyncpa [#allocation3], 1
    %s687 = scalar_lea.sflag [#allocation3], 1
    %688 = vsyncpa %s687, 1
    %689 = vsyncpa [#allocation6], 1
    %690 = vsyncpa [#allocation4], 1
    %s691 = scalar_lea.sflag [#allocation4], 1
    %692 = vsyncpa %s691, 1

</llo_original>
